<compile_context>
chip_gen: v5e
topology: v5e:2x2
jax: 0.10.0
libtpu: 0.0.40
codegen_flags: <defaults>
</compile_context>

<pallas_src>
import functools

import jax
import jax.numpy as jnp
from jax.experimental import pallas as pl
from jax.experimental.pallas import tpu as pltpu

K = 7          # kernel_size=7 in the PyTorch module
P = K // 2     # padding = 3


def _spatial_attention_kernel(w_ref, cj_ref, x_ref, o_ref, rs_ref, *, H, W):
    """One block of BN images per grid step, spatial dims flattened to HW.

    w_ref : (2*K*K,) f32 SMEM      -- conv1 weight flattened as [in_c, ky, kx].
    cj_ref: (1, HW)  int32 VMEM    -- column index j = k % W of each flat pixel.
    x_ref : (BN, C, HW) VMEM       -- input block (any float dtype).
    o_ref : (BN, 1, HW) VMEM       -- sigmoid(conv) output block.
    rs_ref: (2, K, BN, HW) f32 VMEM scratch -- masked row-shifted pooled maps.
    """
    BN, C, HW = x_ref.shape

    # 98 conv taps, read once per grid step from SMEM (shared by all images).
    w = [[[w_ref[c * K * K + ky * K + kx] for kx in range(K)]
          for ky in range(K)] for c in range(2)]

    # Flat pixel index (row masks) and column index (column masks), hoisted.
    fk = jax.lax.broadcasted_iota(jnp.int32, (1, HW), 1)
    cj = cj_ref[...]

    # ---- channel pooling: mean & max over dim=1 (lane-dense VPU/XLU) ----
    x = x_ref[...].astype(jnp.float32)            # (BN, C, HW)
    avg = jnp.sum(x, axis=1) * (1.0 / C)          # (BN, HW)
    mx = jnp.max(x, axis=1)                       # (BN, HW)

    # ---- 14 masked row-shifted copies -> VMEM scratch (bounds live ranges):
    # rs[c, dy][b, k] = feat_c[b, k + (dy - P) * W] if the row is in range, 0 otherwise.
    for dy in range(K):
        d = dy - P
        lo = max(0, -d) * W
        hi = min(H, H - d) * W
        rmask = (fk >= lo) & (fk < hi) if (lo > 0 or hi < HW) else None
        for c, feat in enumerate((avg, mx)):
            sh = feat if d == 0 else pltpu.roll(feat, (-d * W) % HW, 1)
            if rmask is not None:
                sh = jnp.where(rmask, sh, 0.0)
            rs_ref[c, dy] = sh

    # ---- 7 column offsets: 14 FMAs each (operands streamed from scratch),
    # then one column roll + mask, accumulated into acc.
    acc = jnp.zeros((BN, HW), jnp.float32)
    for dx in range(K):
        e = dx - P
        comb = w[0][0][dx] * rs_ref[0, 0]
        comb = comb + w[1][0][dx] * rs_ref[1, 0]
        for dy in range(1, K):
            for c in range(2):
                comb = comb + w[c][dy][dx] * rs_ref[c, dy]
        if e == 0:
            acc = acc + comb
        else:
            sh = pltpu.roll(comb, (-e) % HW, 1)
            cmask = (cj >= max(0, -e)) & (cj < min(W, W - e))
            acc = acc + jnp.where(cmask, sh, 0.0)

    o_ref[:, 0, :] = jax.nn.sigmoid(acc).astype(o_ref.dtype)


def _pick_block_n(n, per_img_in_bytes, per_img_slab_bytes, *,
                  target_in_bytes=2 << 20, max_slab_bytes=128 << 10):
    """Images per grid step.

    - target ~target_in_bytes of input per step (amortize ~0.35us/step + DMA),
    - cap so the per-step pooled working slab stays far inside the vreg file,
    - keep >= 2 grid steps when N >= 2, preferring an EVEN number of steps so
      the "parallel" batch axis splits evenly across both v7x TensorCores.
    """
    if n <= 1:
        return 1
    want = max(1, target_in_bytes // max(per_img_in_bytes, 1))
    want = min(want, max(1, max_slab_bytes // max(per_img_slab_bytes, 1)))
    want = min(want, n // 2)
    divs = [d for d in range(1, n + 1) if n % d == 0 and d <= want]
    if not divs:
        return 1
    return max(divs, key=lambda d: ((n // d) % 2 == 0, d))


def spatial_attention(x, conv_weight, *, block_n=None):
    """x: (N, C, H, W) float; conv_weight: (1, 2, K, K) -> (N, 1, H, W)."""
    N, C, H, W = x.shape
    HW = H * W
    itemsize = jnp.dtype(x.dtype).itemsize

    if block_n is None:
        block_n = _pick_block_n(N, C * HW * itemsize, HW * 4)
    assert N % block_n == 0, (N, block_n)
    BN = block_n

    x_flat = x.reshape(N, C, HW)                            # layout-only reshape
    w_flat = conv_weight.reshape(-1).astype(jnp.float32)    # (2*K*K,)
    col_idx = jnp.tile(jnp.arange(W, dtype=jnp.int32), H).reshape(1, HW)

    # Double-buffered in/out blocks + row-shift scratch + column-index map.
    vmem_need = (2 * BN * C * HW * itemsize + 2 * BN * HW * itemsize
                 + 2 * K * BN * HW * 4 + HW * 4)
    vmem_limit = int(min(64 << 20, max(32 << 20, 2 * vmem_need)))

    kernel = functools.partial(_spatial_attention_kernel, H=H, W=W)

    out = pl.pallas_call(
        kernel,
        out_shape=jax.ShapeDtypeStruct((N, 1, HW), x.dtype),
        grid=(N // BN,),
        in_specs=[
            pl.BlockSpec(memory_space=pltpu.MemorySpace.SMEM),      # 98 taps
            pl.BlockSpec((1, HW), lambda n: (0, 0)),                # col index
            pl.BlockSpec((BN, C, HW), lambda n: (n, 0, 0)),         # x block
        ],
        out_specs=pl.BlockSpec((BN, 1, HW), lambda n: (n, 0, 0)),
        scratch_shapes=[pltpu.VMEM((2, K, BN, HW), jnp.float32)],
        compiler_params=pltpu.CompilerParams(
            dimension_semantics=("parallel",),
            vmem_limit_bytes=vmem_limit),
    )(w_flat, col_idx, x_flat)
    return out.reshape(N, 1, H, W)


def spatial_attention_ref(x, conv_weight):
    """Pure-JAX reference mirroring the PyTorch forward."""
    avg = jnp.mean(x, axis=1, keepdims=True)
    mx = jnp.max(x, axis=1, keepdims=True)
    f = jnp.concatenate([avg, mx], axis=1)
    y = jax.lax.conv_general_dilated(
        f, conv_weight, window_strides=(1, 1),
        padding=((P, P), (P, P)),
        dimension_numbers=("NCHW", "OIHW", "NCHW"),
        precision=jax.lax.Precision.HIGHEST)
    return jax.nn.sigmoid(y)


if __name__ == "__main__":
    key = jax.random.PRNGKey(0)
    kx, kw = jax.random.split(key)
    # Small shapes consistent with the module: batch=2, channels=4, spatial=16.
    x = jax.random.normal(kx, (2, 4, 16, 16), dtype=jnp.float32)
    # Deterministic synthetic conv1 weight: nn.Conv2d(2, 1, 7, bias=False).
    conv_weight = 0.1 * jax.random.normal(kw, (1, 2, K, K), dtype=jnp.float32)

    out = jax.block_until_ready(spatial_attention(x, conv_weight))
    ref = spatial_attention_ref(x, conv_weight)

    assert out.shape == (2, 1, 16, 16), out.shape
    assert jnp.allclose(out, ref, atol=1e-4, rtol=1e-4), float(
        jnp.max(jnp.abs(out - ref)))
    print("KERNEL_OK")
</pallas_src>

<mosaic_0001>
module attributes {stable_mosaic.version = 11 : i64} {
  func.func @_spatial_attention_kernel(%arg0: i32, %arg1: memref<98xf32, #tpu.memory_space<smem>>, %arg2: memref<1x256xi32, #tpu.memory_space<vmem>>, %arg3: memref<1x4x256xf32, #tpu.memory_space<vmem>>, %arg4: memref<1x1x256xf32, #tpu.memory_space<vmem>>, %arg5: memref<2x7x1x256xf32, #tpu.memory_space<vmem>>) attributes {dimension_semantics = [#tpu.dimension_semantics<parallel>], iteration_bounds = array<i64: 2>, scalar_prefetch = 0 : i64, scratch_operands = 1 : i64, tpu.core_type = #tpu.core_type<tc>, window_params = [{transform_indices = @transform_0, window_bounds = array<i64: 98>}, {pipeline_mode = #tpu.pipeline_mode<synchronous>, transform_indices = @transform_1, window_bounds = array<i64: 1, 256>}, {transform_indices = @transform_2, window_bounds = array<i64: 1, 4, 256>}, {transform_indices = @transform_3, window_bounds = array<i64: 1, 1, 256>}]} {
    %c0 = arith.constant 0 : index
    %0 = memref.load %arg1[%c0] : memref<98xf32, #tpu.memory_space<smem>>
    %c1 = arith.constant 1 : index
    %1 = memref.load %arg1[%c1] : memref<98xf32, #tpu.memory_space<smem>>
    %c2 = arith.constant 2 : index
    %2 = memref.load %arg1[%c2] : memref<98xf32, #tpu.memory_space<smem>>
    %c3 = arith.constant 3 : index
    %3 = memref.load %arg1[%c3] : memref<98xf32, #tpu.memory_space<smem>>
    %c4 = arith.constant 4 : index
    %4 = memref.load %arg1[%c4] : memref<98xf32, #tpu.memory_space<smem>>
    %c5 = arith.constant 5 : index
    %5 = memref.load %arg1[%c5] : memref<98xf32, #tpu.memory_space<smem>>
    %c6 = arith.constant 6 : index
    %6 = memref.load %arg1[%c6] : memref<98xf32, #tpu.memory_space<smem>>
    %c7 = arith.constant 7 : index
    %7 = memref.load %arg1[%c7] : memref<98xf32, #tpu.memory_space<smem>>
    %c8 = arith.constant 8 : index
    %8 = memref.load %arg1[%c8] : memref<98xf32, #tpu.memory_space<smem>>
    %c9 = arith.constant 9 : index
    %9 = memref.load %arg1[%c9] : memref<98xf32, #tpu.memory_space<smem>>
    %c10 = arith.constant 10 : index
    %10 = memref.load %arg1[%c10] : memref<98xf32, #tpu.memory_space<smem>>
    %c11 = arith.constant 11 : index
    %11 = memref.load %arg1[%c11] : memref<98xf32, #tpu.memory_space<smem>>
    %c12 = arith.constant 12 : index
    %12 = memref.load %arg1[%c12] : memref<98xf32, #tpu.memory_space<smem>>
    %c13 = arith.constant 13 : index
    %13 = memref.load %arg1[%c13] : memref<98xf32, #tpu.memory_space<smem>>
    %c14 = arith.constant 14 : index
    %14 = memref.load %arg1[%c14] : memref<98xf32, #tpu.memory_space<smem>>
    %c15 = arith.constant 15 : index
    %15 = memref.load %arg1[%c15] : memref<98xf32, #tpu.memory_space<smem>>
    %c16 = arith.constant 16 : index
    %16 = memref.load %arg1[%c16] : memref<98xf32, #tpu.memory_space<smem>>
    %c17 = arith.constant 17 : index
    %17 = memref.load %arg1[%c17] : memref<98xf32, #tpu.memory_space<smem>>
    %c18 = arith.constant 18 : index
    %18 = memref.load %arg1[%c18] : memref<98xf32, #tpu.memory_space<smem>>
    %c19 = arith.constant 19 : index
    %19 = memref.load %arg1[%c19] : memref<98xf32, #tpu.memory_space<smem>>
    %c20 = arith.constant 20 : index
    %20 = memref.load %arg1[%c20] : memref<98xf32, #tpu.memory_space<smem>>
    %c21 = arith.constant 21 : index
    %21 = memref.load %arg1[%c21] : memref<98xf32, #tpu.memory_space<smem>>
    %c22 = arith.constant 22 : index
    %22 = memref.load %arg1[%c22] : memref<98xf32, #tpu.memory_space<smem>>
    %c23 = arith.constant 23 : index
    %23 = memref.load %arg1[%c23] : memref<98xf32, #tpu.memory_space<smem>>
    %c24 = arith.constant 24 : index
    %24 = memref.load %arg1[%c24] : memref<98xf32, #tpu.memory_space<smem>>
    %c25 = arith.constant 25 : index
    %25 = memref.load %arg1[%c25] : memref<98xf32, #tpu.memory_space<smem>>
    %c26 = arith.constant 26 : index
    %26 = memref.load %arg1[%c26] : memref<98xf32, #tpu.memory_space<smem>>
    %c27 = arith.constant 27 : index
    %27 = memref.load %arg1[%c27] : memref<98xf32, #tpu.memory_space<smem>>
    %c28 = arith.constant 28 : index
    %28 = memref.load %arg1[%c28] : memref<98xf32, #tpu.memory_space<smem>>
    %c29 = arith.constant 29 : index
    %29 = memref.load %arg1[%c29] : memref<98xf32, #tpu.memory_space<smem>>
    %c30 = arith.constant 30 : index
    %30 = memref.load %arg1[%c30] : memref<98xf32, #tpu.memory_space<smem>>
    %c31 = arith.constant 31 : index
    %31 = memref.load %arg1[%c31] : memref<98xf32, #tpu.memory_space<smem>>
    %c32 = arith.constant 32 : index
    %32 = memref.load %arg1[%c32] : memref<98xf32, #tpu.memory_space<smem>>
    %c33 = arith.constant 33 : index
    %33 = memref.load %arg1[%c33] : memref<98xf32, #tpu.memory_space<smem>>
    %c34 = arith.constant 34 : index
    %34 = memref.load %arg1[%c34] : memref<98xf32, #tpu.memory_space<smem>>
    %c35 = arith.constant 35 : index
    %35 = memref.load %arg1[%c35] : memref<98xf32, #tpu.memory_space<smem>>
    %c36 = arith.constant 36 : index
    %36 = memref.load %arg1[%c36] : memref<98xf32, #tpu.memory_space<smem>>
    %c37 = arith.constant 37 : index
    %37 = memref.load %arg1[%c37] : memref<98xf32, #tpu.memory_space<smem>>
    %c38 = arith.constant 38 : index
    %38 = memref.load %arg1[%c38] : memref<98xf32, #tpu.memory_space<smem>>
    %c39 = arith.constant 39 : index
    %39 = memref.load %arg1[%c39] : memref<98xf32, #tpu.memory_space<smem>>
    %c40 = arith.constant 40 : index
    %40 = memref.load %arg1[%c40] : memref<98xf32, #tpu.memory_space<smem>>
    %c41 = arith.constant 41 : index
    %41 = memref.load %arg1[%c41] : memref<98xf32, #tpu.memory_space<smem>>
    %c42 = arith.constant 42 : index
    %42 = memref.load %arg1[%c42] : memref<98xf32, #tpu.memory_space<smem>>
    %c43 = arith.constant 43 : index
    %43 = memref.load %arg1[%c43] : memref<98xf32, #tpu.memory_space<smem>>
    %c44 = arith.constant 44 : index
    %44 = memref.load %arg1[%c44] : memref<98xf32, #tpu.memory_space<smem>>
    %c45 = arith.constant 45 : index
    %45 = memref.load %arg1[%c45] : memref<98xf32, #tpu.memory_space<smem>>
    %c46 = arith.constant 46 : index
    %46 = memref.load %arg1[%c46] : memref<98xf32, #tpu.memory_space<smem>>
    %c47 = arith.constant 47 : index
    %47 = memref.load %arg1[%c47] : memref<98xf32, #tpu.memory_space<smem>>
    %c48 = arith.constant 48 : index
    %48 = memref.load %arg1[%c48] : memref<98xf32, #tpu.memory_space<smem>>
    %c49 = arith.constant 49 : index
    %49 = memref.load %arg1[%c49] : memref<98xf32, #tpu.memory_space<smem>>
    %c50 = arith.constant 50 : index
    %50 = memref.load %arg1[%c50] : memref<98xf32, #tpu.memory_space<smem>>
    %c51 = arith.constant 51 : index
    %51 = memref.load %arg1[%c51] : memref<98xf32, #tpu.memory_space<smem>>
    %c52 = arith.constant 52 : index
    %52 = memref.load %arg1[%c52] : memref<98xf32, #tpu.memory_space<smem>>
    %c53 = arith.constant 53 : index
    %53 = memref.load %arg1[%c53] : memref<98xf32, #tpu.memory_space<smem>>
    %c54 = arith.constant 54 : index
    %54 = memref.load %arg1[%c54] : memref<98xf32, #tpu.memory_space<smem>>
    %c55 = arith.constant 55 : index
    %55 = memref.load %arg1[%c55] : memref<98xf32, #tpu.memory_space<smem>>
    %c56 = arith.constant 56 : index
    %56 = memref.load %arg1[%c56] : memref<98xf32, #tpu.memory_space<smem>>
    %c57 = arith.constant 57 : index
    %57 = memref.load %arg1[%c57] : memref<98xf32, #tpu.memory_space<smem>>
    %c58 = arith.constant 58 : index
    %58 = memref.load %arg1[%c58] : memref<98xf32, #tpu.memory_space<smem>>
    %c59 = arith.constant 59 : index
    %59 = memref.load %arg1[%c59] : memref<98xf32, #tpu.memory_space<smem>>
    %c60 = arith.constant 60 : index
    %60 = memref.load %arg1[%c60] : memref<98xf32, #tpu.memory_space<smem>>
    %c61 = arith.constant 61 : index
    %61 = memref.load %arg1[%c61] : memref<98xf32, #tpu.memory_space<smem>>
    %c62 = arith.constant 62 : index
    %62 = memref.load %arg1[%c62] : memref<98xf32, #tpu.memory_space<smem>>
    %c63 = arith.constant 63 : index
    %63 = memref.load %arg1[%c63] : memref<98xf32, #tpu.memory_space<smem>>
    %c64 = arith.constant 64 : index
    %64 = memref.load %arg1[%c64] : memref<98xf32, #tpu.memory_space<smem>>
    %c65 = arith.constant 65 : index
    %65 = memref.load %arg1[%c65] : memref<98xf32, #tpu.memory_space<smem>>
    %c66 = arith.constant 66 : index
    %66 = memref.load %arg1[%c66] : memref<98xf32, #tpu.memory_space<smem>>
    %c67 = arith.constant 67 : index
    %67 = memref.load %arg1[%c67] : memref<98xf32, #tpu.memory_space<smem>>
    %c68 = arith.constant 68 : index
    %68 = memref.load %arg1[%c68] : memref<98xf32, #tpu.memory_space<smem>>
    %c69 = arith.constant 69 : index
    %69 = memref.load %arg1[%c69] : memref<98xf32, #tpu.memory_space<smem>>
    %c70 = arith.constant 70 : index
    %70 = memref.load %arg1[%c70] : memref<98xf32, #tpu.memory_space<smem>>
    %c71 = arith.constant 71 : index
    %71 = memref.load %arg1[%c71] : memref<98xf32, #tpu.memory_space<smem>>
    %c72 = arith.constant 72 : index
    %72 = memref.load %arg1[%c72] : memref<98xf32, #tpu.memory_space<smem>>
    %c73 = arith.constant 73 : index
    %73 = memref.load %arg1[%c73] : memref<98xf32, #tpu.memory_space<smem>>
    %c74 = arith.constant 74 : index
    %74 = memref.load %arg1[%c74] : memref<98xf32, #tpu.memory_space<smem>>
    %c75 = arith.constant 75 : index
    %75 = memref.load %arg1[%c75] : memref<98xf32, #tpu.memory_space<smem>>
    %c76 = arith.constant 76 : index
    %76 = memref.load %arg1[%c76] : memref<98xf32, #tpu.memory_space<smem>>
    %c77 = arith.constant 77 : index
    %77 = memref.load %arg1[%c77] : memref<98xf32, #tpu.memory_space<smem>>
    %c78 = arith.constant 78 : index
    %78 = memref.load %arg1[%c78] : memref<98xf32, #tpu.memory_space<smem>>
    %c79 = arith.constant 79 : index
    %79 = memref.load %arg1[%c79] : memref<98xf32, #tpu.memory_space<smem>>
    %c80 = arith.constant 80 : index
    %80 = memref.load %arg1[%c80] : memref<98xf32, #tpu.memory_space<smem>>
    %c81 = arith.constant 81 : index
    %81 = memref.load %arg1[%c81] : memref<98xf32, #tpu.memory_space<smem>>
    %c82 = arith.constant 82 : index
    %82 = memref.load %arg1[%c82] : memref<98xf32, #tpu.memory_space<smem>>
    %c83 = arith.constant 83 : index
    %83 = memref.load %arg1[%c83] : memref<98xf32, #tpu.memory_space<smem>>
    %c84 = arith.constant 84 : index
    %84 = memref.load %arg1[%c84] : memref<98xf32, #tpu.memory_space<smem>>
    %c85 = arith.constant 85 : index
    %85 = memref.load %arg1[%c85] : memref<98xf32, #tpu.memory_space<smem>>
    %c86 = arith.constant 86 : index
    %86 = memref.load %arg1[%c86] : memref<98xf32, #tpu.memory_space<smem>>
    %c87 = arith.constant 87 : index
    %87 = memref.load %arg1[%c87] : memref<98xf32, #tpu.memory_space<smem>>
    %c88 = arith.constant 88 : index
    %88 = memref.load %arg1[%c88] : memref<98xf32, #tpu.memory_space<smem>>
    %c89 = arith.constant 89 : index
    %89 = memref.load %arg1[%c89] : memref<98xf32, #tpu.memory_space<smem>>
    %c90 = arith.constant 90 : index
    %90 = memref.load %arg1[%c90] : memref<98xf32, #tpu.memory_space<smem>>
    %c91 = arith.constant 91 : index
    %91 = memref.load %arg1[%c91] : memref<98xf32, #tpu.memory_space<smem>>
    %c92 = arith.constant 92 : index
    %92 = memref.load %arg1[%c92] : memref<98xf32, #tpu.memory_space<smem>>
    %c93 = arith.constant 93 : index
    %93 = memref.load %arg1[%c93] : memref<98xf32, #tpu.memory_space<smem>>
    %c94 = arith.constant 94 : index
    %94 = memref.load %arg1[%c94] : memref<98xf32, #tpu.memory_space<smem>>
    %c95 = arith.constant 95 : index
    %95 = memref.load %arg1[%c95] : memref<98xf32, #tpu.memory_space<smem>>
    %c96 = arith.constant 96 : index
    %96 = memref.load %arg1[%c96] : memref<98xf32, #tpu.memory_space<smem>>
    %c97 = arith.constant 97 : index
    %97 = memref.load %arg1[%c97] : memref<98xf32, #tpu.memory_space<smem>>
    %98 = tpu.iota {dimensions = array<i32: 1>} : vector<1x256xi32>
    %c0_0 = arith.constant 0 : index
    %c0_1 = arith.constant 0 : index
    %99 = vector.load %arg2[%c0_0, %c0_1] : memref<1x256xi32, #tpu.memory_space<vmem>>, vector<1x256xi32>
    %c0_2 = arith.constant 0 : index
    %c0_3 = arith.constant 0 : index
    %c0_4 = arith.constant 0 : index
    %100 = vector.load %arg3[%c0_2, %c0_3, %c0_4] : memref<1x4x256xf32, #tpu.memory_space<vmem>>, vector<1x4x256xf32>
    %cst = arith.constant dense<0.000000e+00> : vector<1x256xf32>
    %101 = vector.multi_reduction <add>, %100, %cst [1] : vector<1x4x256xf32> to vector<1x256xf32>
    %cst_5 = arith.constant 2.500000e-01 : f32
    %102 = vector.broadcast %cst_5 : f32 to vector<1x256xf32>
    %103 = arith.mulf %101, %102 : vector<1x256xf32>
    %cst_6 = arith.constant dense<0xFF800000> : vector<1x256xf32>
    %104 = vector.multi_reduction <maximumf>, %100, %cst_6 [1] : vector<1x4x256xf32> to vector<1x256xf32>
    %c48_i32 = arith.constant 48 : i32
    %105 = vector.broadcast %c48_i32 : i32 to vector<1x256xi32>
    %106 = arith.cmpi sge, %98, %105 : vector<1x256xi32>
    %c256_i32 = arith.constant 256 : i32
    %107 = vector.broadcast %c256_i32 : i32 to vector<1x256xi32>
    %108 = arith.cmpi slt, %98, %107 : vector<1x256xi32>
    %109 = arith.andi %106, %108 : vector<1x256xi1>
    %c48_i32_7 = arith.constant 48 : i32
    %110 = tpu.dynamic_rotate %103 by %c48_i32_7 dim 1 : vector<1x256xf32>, i32 -> vector<1x256xf32>
    %cst_8 = arith.constant 0.000000e+00 : f32
    %111 = vector.broadcast %cst_8 : f32 to vector<1x256xf32>
    %112 = arith.select %109, %110, %111 : vector<1x256xi1>, vector<1x256xf32>
    %c0_9 = arith.constant 0 : index
    %c0_10 = arith.constant 0 : index
    %c0_11 = arith.constant 0 : index
    %c0_12 = arith.constant 0 : index
    %113 = vector.load %arg5[%c0_9, %c0_10, %c0_11, %c0_12] : memref<2x7x1x256xf32, #tpu.memory_space<vmem>>, vector<1x1x1x256xf32>
    %114 = vector.shape_cast %113 : vector<1x1x1x256xf32> to vector<1x256xf32>
    %115 = vector.shape_cast %112 : vector<1x256xf32> to vector<1x1x1x256xf32>
    tpu.vector_store %arg5[%c0_9, %c0_10, %c0_11, %c0_12], %115 {strides = array<i32>} : memref<2x7x1x256xf32, #tpu.memory_space<vmem>>, vector<1x1x1x256xf32>,
    %c48_i32_13 = arith.constant 48 : i32
    %116 = tpu.dynamic_rotate %104 by %c48_i32_13 dim 1 : vector<1x256xf32>, i32 -> vector<1x256xf32>
    %cst_14 = arith.constant 0.000000e+00 : f32
    %117 = vector.broadcast %cst_14 : f32 to vector<1x256xf32>
    %118 = arith.select %109, %116, %117 : vector<1x256xi1>, vector<1x256xf32>
    %c1_15 = arith.constant 1 : index
    %c0_16 = arith.constant 0 : index
    %c0_17 = arith.constant 0 : index
    %c0_18 = arith.constant 0 : index
    %119 = vector.load %arg5[%c1_15, %c0_16, %c0_17, %c0_18] : memref<2x7x1x256xf32, #tpu.memory_space<vmem>>, vector<1x1x1x256xf32>
    %120 = vector.shape_cast %119 : vector<1x1x1x256xf32> to vector<1x256xf32>
    %121 = vector.shape_cast %118 : vector<1x256xf32> to vector<1x1x1x256xf32>
    tpu.vector_store %arg5[%c1_15, %c0_16, %c0_17, %c0_18], %121 {strides = array<i32>} : memref<2x7x1x256xf32, #tpu.memory_space<vmem>>, vector<1x1x1x256xf32>,
    %c32_i32 = arith.constant 32 : i32
    %122 = vector.broadcast %c32_i32 : i32 to vector<1x256xi32>
    %123 = arith.cmpi sge, %98, %122 : vector<1x256xi32>
    %c256_i32_19 = arith.constant 256 : i32
    %124 = vector.broadcast %c256_i32_19 : i32 to vector<1x256xi32>
    %125 = arith.cmpi slt, %98, %124 : vector<1x256xi32>
    %126 = arith.andi %123, %125 : vector<1x256xi1>
    %c32_i32_20 = arith.constant 32 : i32
    %127 = tpu.dynamic_rotate %103 by %c32_i32_20 dim 1 : vector<1x256xf32>, i32 -> vector<1x256xf32>
    %cst_21 = arith.constant 0.000000e+00 : f32
    %128 = vector.broadcast %cst_21 : f32 to vector<1x256xf32>
    %129 = arith.select %126, %127, %128 : vector<1x256xi1>, vector<1x256xf32>
    %c0_22 = arith.constant 0 : index
    %c1_23 = arith.constant 1 : index
    %c0_24 = arith.constant 0 : index
    %c0_25 = arith.constant 0 : index
    %130 = vector.load %arg5[%c0_22, %c1_23, %c0_24, %c0_25] : memref<2x7x1x256xf32, #tpu.memory_space<vmem>>, vector<1x1x1x256xf32>
    %131 = vector.shape_cast %130 : vector<1x1x1x256xf32> to vector<1x256xf32>
    %132 = vector.shape_cast %129 : vector<1x256xf32> to vector<1x1x1x256xf32>
    tpu.vector_store %arg5[%c0_22, %c1_23, %c0_24, %c0_25], %132 {strides = array<i32>} : memref<2x7x1x256xf32, #tpu.memory_space<vmem>>, vector<1x1x1x256xf32>,
    %c32_i32_26 = arith.constant 32 : i32
    %133 = tpu.dynamic_rotate %104 by %c32_i32_26 dim 1 : vector<1x256xf32>, i32 -> vector<1x256xf32>
    %cst_27 = arith.constant 0.000000e+00 : f32
    %134 = vector.broadcast %cst_27 : f32 to vector<1x256xf32>
    %135 = arith.select %126, %133, %134 : vector<1x256xi1>, vector<1x256xf32>
    %c1_28 = arith.constant 1 : index
    %c1_29 = arith.constant 1 : index
    %c0_30 = arith.constant 0 : index
    %c0_31 = arith.constant 0 : index
    %136 = vector.load %arg5[%c1_28, %c1_29, %c0_30, %c0_31] : memref<2x7x1x256xf32, #tpu.memory_space<vmem>>, vector<1x1x1x256xf32>
    %137 = vector.shape_cast %136 : vector<1x1x1x256xf32> to vector<1x256xf32>
    %138 = vector.shape_cast %135 : vector<1x256xf32> to vector<1x1x1x256xf32>
    tpu.vector_store %arg5[%c1_28, %c1_29, %c0_30, %c0_31], %138 {strides = array<i32>} : memref<2x7x1x256xf32, #tpu.memory_space<vmem>>, vector<1x1x1x256xf32>,
    %c16_i32 = arith.constant 16 : i32
    %139 = vector.broadcast %c16_i32 : i32 to vector<1x256xi32>
    %140 = arith.cmpi sge, %98, %139 : vector<1x256xi32>
    %c256_i32_32 = arith.constant 256 : i32
    %141 = vector.broadcast %c256_i32_32 : i32 to vector<1x256xi32>
    %142 = arith.cmpi slt, %98, %141 : vector<1x256xi32>
    %143 = arith.andi %140, %142 : vector<1x256xi1>
    %c16_i32_33 = arith.constant 16 : i32
    %144 = tpu.dynamic_rotate %103 by %c16_i32_33 dim 1 : vector<1x256xf32>, i32 -> vector<1x256xf32>
    %cst_34 = arith.constant 0.000000e+00 : f32
    %145 = vector.broadcast %cst_34 : f32 to vector<1x256xf32>
    %146 = arith.select %143, %144, %145 : vector<1x256xi1>, vector<1x256xf32>
    %c0_35 = arith.constant 0 : index
    %c2_36 = arith.constant 2 : index
    %c0_37 = arith.constant 0 : index
    %c0_38 = arith.constant 0 : index
    %147 = vector.load %arg5[%c0_35, %c2_36, %c0_37, %c0_38] : memref<2x7x1x256xf32, #tpu.memory_space<vmem>>, vector<1x1x1x256xf32>
    %148 = vector.shape_cast %147 : vector<1x1x1x256xf32> to vector<1x256xf32>
    %149 = vector.shape_cast %146 : vector<1x256xf32> to vector<1x1x1x256xf32>
    tpu.vector_store %arg5[%c0_35, %c2_36, %c0_37, %c0_38], %149 {strides = array<i32>} : memref<2x7x1x256xf32, #tpu.memory_space<vmem>>, vector<1x1x1x256xf32>,
    %c16_i32_39 = arith.constant 16 : i32
    %150 = tpu.dynamic_rotate %104 by %c16_i32_39 dim 1 : vector<1x256xf32>, i32 -> vector<1x256xf32>
    %cst_40 = arith.constant 0.000000e+00 : f32
    %151 = vector.broadcast %cst_40 : f32 to vector<1x256xf32>
    %152 = arith.select %143, %150, %151 : vector<1x256xi1>, vector<1x256xf32>
    %c1_41 = arith.constant 1 : index
    %c2_42 = arith.constant 2 : index
    %c0_43 = arith.constant 0 : index
    %c0_44 = arith.constant 0 : index
    %153 = vector.load %arg5[%c1_41, %c2_42, %c0_43, %c0_44] : memref<2x7x1x256xf32, #tpu.memory_space<vmem>>, vector<1x1x1x256xf32>
    %154 = vector.shape_cast %153 : vector<1x1x1x256xf32> to vector<1x256xf32>
    %155 = vector.shape_cast %152 : vector<1x256xf32> to vector<1x1x1x256xf32>
    tpu.vector_store %arg5[%c1_41, %c2_42, %c0_43, %c0_44], %155 {strides = array<i32>} : memref<2x7x1x256xf32, #tpu.memory_space<vmem>>, vector<1x1x1x256xf32>,
    %c0_45 = arith.constant 0 : index
    %c3_46 = arith.constant 3 : index
    %c0_47 = arith.constant 0 : index
    %c0_48 = arith.constant 0 : index
    %156 = vector.load %arg5[%c0_45, %c3_46, %c0_47, %c0_48] : memref<2x7x1x256xf32, #tpu.memory_space<vmem>>, vector<1x1x1x256xf32>
    %157 = vector.shape_cast %156 : vector<1x1x1x256xf32> to vector<1x256xf32>
    %158 = vector.shape_cast %103 : vector<1x256xf32> to vector<1x1x1x256xf32>
    tpu.vector_store %arg5[%c0_45, %c3_46, %c0_47, %c0_48], %158 {strides = array<i32>} : memref<2x7x1x256xf32, #tpu.memory_space<vmem>>, vector<1x1x1x256xf32>,
    %c1_49 = arith.constant 1 : index
    %c3_50 = arith.constant 3 : index
    %c0_51 = arith.constant 0 : index
    %c0_52 = arith.constant 0 : index
    %159 = vector.load %arg5[%c1_49, %c3_50, %c0_51, %c0_52] : memref<2x7x1x256xf32, #tpu.memory_space<vmem>>, vector<1x1x1x256xf32>
    %160 = vector.shape_cast %159 : vector<1x1x1x256xf32> to vector<1x256xf32>
    %161 = vector.shape_cast %104 : vector<1x256xf32> to vector<1x1x1x256xf32>
    tpu.vector_store %arg5[%c1_49, %c3_50, %c0_51, %c0_52], %161 {strides = array<i32>} : memref<2x7x1x256xf32, #tpu.memory_space<vmem>>, vector<1x1x1x256xf32>,
    %c0_i32 = arith.constant 0 : i32
    %162 = vector.broadcast %c0_i32 : i32 to vector<1x256xi32>
    %163 = arith.cmpi sge, %98, %162 : vector<1x256xi32>
    %c240_i32 = arith.constant 240 : i32
    %164 = vector.broadcast %c240_i32 : i32 to vector<1x256xi32>
    %165 = arith.cmpi slt, %98, %164 : vector<1x256xi32>
    %166 = arith.andi %163, %165 : vector<1x256xi1>
    %c240_i32_53 = arith.constant 240 : i32
    %167 = tpu.dynamic_rotate %103 by %c240_i32_53 dim 1 : vector<1x256xf32>, i32 -> vector<1x256xf32>
    %cst_54 = arith.constant 0.000000e+00 : f32
    %168 = vector.broadcast %cst_54 : f32 to vector<1x256xf32>
    %169 = arith.select %166, %167, %168 : vector<1x256xi1>, vector<1x256xf32>
    %c0_55 = arith.constant 0 : index
    %c4_56 = arith.constant 4 : index
    %c0_57 = arith.constant 0 : index
    %c0_58 = arith.constant 0 : index
    %170 = vector.load %arg5[%c0_55, %c4_56, %c0_57, %c0_58] : memref<2x7x1x256xf32, #tpu.memory_space<vmem>>, vector<1x1x1x256xf32>
    %171 = vector.shape_cast %170 : vector<1x1x1x256xf32> to vector<1x256xf32>
    %172 = vector.shape_cast %169 : vector<1x256xf32> to vector<1x1x1x256xf32>
    tpu.vector_store %arg5[%c0_55, %c4_56, %c0_57, %c0_58], %172 {strides = array<i32>} : memref<2x7x1x256xf32, #tpu.memory_space<vmem>>, vector<1x1x1x256xf32>,
    %c240_i32_59 = arith.constant 240 : i32
    %173 = tpu.dynamic_rotate %104 by %c240_i32_59 dim 1 : vector<1x256xf32>, i32 -> vector<1x256xf32>
    %cst_60 = arith.constant 0.000000e+00 : f32
    %174 = vector.broadcast %cst_60 : f32 to vector<1x256xf32>
    %175 = arith.select %166, %173, %174 : vector<1x256xi1>, vector<1x256xf32>
    %c1_61 = arith.constant 1 : index
    %c4_62 = arith.constant 4 : index
    %c0_63 = arith.constant 0 : index
    %c0_64 = arith.constant 0 : index
    %176 = vector.load %arg5[%c1_61, %c4_62, %c0_63, %c0_64] : memref<2x7x1x256xf32, #tpu.memory_space<vmem>>, vector<1x1x1x256xf32>
    %177 = vector.shape_cast %176 : vector<1x1x1x256xf32> to vector<1x256xf32>
    %178 = vector.shape_cast %175 : vector<1x256xf32> to vector<1x1x1x256xf32>
    tpu.vector_store %arg5[%c1_61, %c4_62, %c0_63, %c0_64], %178 {strides = array<i32>} : memref<2x7x1x256xf32, #tpu.memory_space<vmem>>, vector<1x1x1x256xf32>,
    %c0_i32_65 = arith.constant 0 : i32
    %179 = vector.broadcast %c0_i32_65 : i32 to vector<1x256xi32>
    %180 = arith.cmpi sge, %98, %179 : vector<1x256xi32>
    %c224_i32 = arith.constant 224 : i32
    %181 = vector.broadcast %c224_i32 : i32 to vector<1x256xi32>
    %182 = arith.cmpi slt, %98, %181 : vector<1x256xi32>
    %183 = arith.andi %180, %182 : vector<1x256xi1>
    %c224_i32_66 = arith.constant 224 : i32
    %184 = tpu.dynamic_rotate %103 by %c224_i32_66 dim 1 : vector<1x256xf32>, i32 -> vector<1x256xf32>
    %cst_67 = arith.constant 0.000000e+00 : f32
    %185 = vector.broadcast %cst_67 : f32 to vector<1x256xf32>
    %186 = arith.select %183, %184, %185 : vector<1x256xi1>, vector<1x256xf32>
    %c0_68 = arith.constant 0 : index
    %c5_69 = arith.constant 5 : index
    %c0_70 = arith.constant 0 : index
    %c0_71 = arith.constant 0 : index
    %187 = vector.load %arg5[%c0_68, %c5_69, %c0_70, %c0_71] : memref<2x7x1x256xf32, #tpu.memory_space<vmem>>, vector<1x1x1x256xf32>
    %188 = vector.shape_cast %187 : vector<1x1x1x256xf32> to vector<1x256xf32>
    %189 = vector.shape_cast %186 : vector<1x256xf32> to vector<1x1x1x256xf32>
    tpu.vector_store %arg5[%c0_68, %c5_69, %c0_70, %c0_71], %189 {strides = array<i32>} : memref<2x7x1x256xf32, #tpu.memory_space<vmem>>, vector<1x1x1x256xf32>,
    %c224_i32_72 = arith.constant 224 : i32
    %190 = tpu.dynamic_rotate %104 by %c224_i32_72 dim 1 : vector<1x256xf32>, i32 -> vector<1x256xf32>
    %cst_73 = arith.constant 0.000000e+00 : f32
    %191 = vector.broadcast %cst_73 : f32 to vector<1x256xf32>
    %192 = arith.select %183, %190, %191 : vector<1x256xi1>, vector<1x256xf32>
    %c1_74 = arith.constant 1 : index
    %c5_75 = arith.constant 5 : index
    %c0_76 = arith.constant 0 : index
    %c0_77 = arith.constant 0 : index
    %193 = vector.load %arg5[%c1_74, %c5_75, %c0_76, %c0_77] : memref<2x7x1x256xf32, #tpu.memory_space<vmem>>, vector<1x1x1x256xf32>
    %194 = vector.shape_cast %193 : vector<1x1x1x256xf32> to vector<1x256xf32>
    %195 = vector.shape_cast %192 : vector<1x256xf32> to vector<1x1x1x256xf32>
    tpu.vector_store %arg5[%c1_74, %c5_75, %c0_76, %c0_77], %195 {strides = array<i32>} : memref<2x7x1x256xf32, #tpu.memory_space<vmem>>, vector<1x1x1x256xf32>,
    %c0_i32_78 = arith.constant 0 : i32
    %196 = vector.broadcast %c0_i32_78 : i32 to vector<1x256xi32>
    %197 = arith.cmpi sge, %98, %196 : vector<1x256xi32>
    %c208_i32 = arith.constant 208 : i32
    %198 = vector.broadcast %c208_i32 : i32 to vector<1x256xi32>
    %199 = arith.cmpi slt, %98, %198 : vector<1x256xi32>
    %200 = arith.andi %197, %199 : vector<1x256xi1>
    %c208_i32_79 = arith.constant 208 : i32
    %201 = tpu.dynamic_rotate %103 by %c208_i32_79 dim 1 : vector<1x256xf32>, i32 -> vector<1x256xf32>
    %cst_80 = arith.constant 0.000000e+00 : f32
    %202 = vector.broadcast %cst_80 : f32 to vector<1x256xf32>
    %203 = arith.select %200, %201, %202 : vector<1x256xi1>, vector<1x256xf32>
    %c0_81 = arith.constant 0 : index
    %c6_82 = arith.constant 6 : index
    %c0_83 = arith.constant 0 : index
    %c0_84 = arith.constant 0 : index
    %204 = vector.load %arg5[%c0_81, %c6_82, %c0_83, %c0_84] : memref<2x7x1x256xf32, #tpu.memory_space<vmem>>, vector<1x1x1x256xf32>
    %205 = vector.shape_cast %204 : vector<1x1x1x256xf32> to vector<1x256xf32>
    %206 = vector.shape_cast %203 : vector<1x256xf32> to vector<1x1x1x256xf32>
    tpu.vector_store %arg5[%c0_81, %c6_82, %c0_83, %c0_84], %206 {strides = array<i32>} : memref<2x7x1x256xf32, #tpu.memory_space<vmem>>, vector<1x1x1x256xf32>,
    %c208_i32_85 = arith.constant 208 : i32
    %207 = tpu.dynamic_rotate %104 by %c208_i32_85 dim 1 : vector<1x256xf32>, i32 -> vector<1x256xf32>
    %cst_86 = arith.constant 0.000000e+00 : f32
    %208 = vector.broadcast %cst_86 : f32 to vector<1x256xf32>
    %209 = arith.select %200, %207, %208 : vector<1x256xi1>, vector<1x256xf32>
    %c1_87 = arith.constant 1 : index
    %c6_88 = arith.constant 6 : index
    %c0_89 = arith.constant 0 : index
    %c0_90 = arith.constant 0 : index
    %210 = vector.load %arg5[%c1_87, %c6_88, %c0_89, %c0_90] : memref<2x7x1x256xf32, #tpu.memory_space<vmem>>, vector<1x1x1x256xf32>
    %211 = vector.shape_cast %210 : vector<1x1x1x256xf32> to vector<1x256xf32>
    %212 = vector.shape_cast %209 : vector<1x256xf32> to vector<1x1x1x256xf32>
    tpu.vector_store %arg5[%c1_87, %c6_88, %c0_89, %c0_90], %212 {strides = array<i32>} : memref<2x7x1x256xf32, #tpu.memory_space<vmem>>, vector<1x1x1x256xf32>,
    %cst_91 = arith.constant 0.000000e+00 : f32
    %213 = vector.broadcast %cst_91 : f32 to vector<1x256xf32>
    %c0_92 = arith.constant 0 : index
    %c0_93 = arith.constant 0 : index
    %c0_94 = arith.constant 0 : index
    %c0_95 = arith.constant 0 : index
    %214 = vector.load %arg5[%c0_92, %c0_93, %c0_94, %c0_95] : memref<2x7x1x256xf32, #tpu.memory_space<vmem>>, vector<1x1x1x256xf32>
    %215 = vector.shape_cast %214 : vector<1x1x1x256xf32> to vector<1x256xf32>
    %216 = vector.broadcast %0 : f32 to vector<1x256xf32>
    %217 = arith.mulf %216, %215 : vector<1x256xf32>
    %c1_96 = arith.constant 1 : index
    %c0_97 = arith.constant 0 : index
    %c0_98 = arith.constant 0 : index
    %c0_99 = arith.constant 0 : index
    %218 = vector.load %arg5[%c1_96, %c0_97, %c0_98, %c0_99] : memref<2x7x1x256xf32, #tpu.memory_space<vmem>>, vector<1x1x1x256xf32>
    %219 = vector.shape_cast %218 : vector<1x1x1x256xf32> to vector<1x256xf32>
    %220 = vector.broadcast %49 : f32 to vector<1x256xf32>
    %221 = arith.mulf %220, %219 : vector<1x256xf32>
    %222 = arith.addf %217, %221 : vector<1x256xf32>
    %c0_100 = arith.constant 0 : index
    %c1_101 = arith.constant 1 : index
    %c0_102 = arith.constant 0 : index
    %c0_103 = arith.constant 0 : index
    %223 = vector.load %arg5[%c0_100, %c1_101, %c0_102, %c0_103] : memref<2x7x1x256xf32, #tpu.memory_space<vmem>>, vector<1x1x1x256xf32>
    %224 = vector.shape_cast %223 : vector<1x1x1x256xf32> to vector<1x256xf32>
    %225 = vector.broadcast %7 : f32 to vector<1x256xf32>
    %226 = arith.mulf %225, %224 : vector<1x256xf32>
    %227 = arith.addf %222, %226 : vector<1x256xf32>
    %c1_104 = arith.constant 1 : index
    %c1_105 = arith.constant 1 : index
    %c0_106 = arith.constant 0 : index
    %c0_107 = arith.constant 0 : index
    %228 = vector.load %arg5[%c1_104, %c1_105, %c0_106, %c0_107] : memref<2x7x1x256xf32, #tpu.memory_space<vmem>>, vector<1x1x1x256xf32>
    %229 = vector.shape_cast %228 : vector<1x1x1x256xf32> to vector<1x256xf32>
    %230 = vector.broadcast %56 : f32 to vector<1x256xf32>
    %231 = arith.mulf %230, %229 : vector<1x256xf32>
    %232 = arith.addf %227, %231 : vector<1x256xf32>
    %c0_108 = arith.constant 0 : index
    %c2_109 = arith.constant 2 : index
    %c0_110 = arith.constant 0 : index
    %c0_111 = arith.constant 0 : index
    %233 = vector.load %arg5[%c0_108, %c2_109, %c0_110, %c0_111] : memref<2x7x1x256xf32, #tpu.memory_space<vmem>>, vector<1x1x1x256xf32>
    %234 = vector.shape_cast %233 : vector<1x1x1x256xf32> to vector<1x256xf32>
    %235 = vector.broadcast %14 : f32 to vector<1x256xf32>
    %236 = arith.mulf %235, %234 : vector<1x256xf32>
    %237 = arith.addf %232, %236 : vector<1x256xf32>
    %c1_112 = arith.constant 1 : index
    %c2_113 = arith.constant 2 : index
    %c0_114 = arith.constant 0 : index
    %c0_115 = arith.constant 0 : index
    %238 = vector.load %arg5[%c1_112, %c2_113, %c0_114, %c0_115] : memref<2x7x1x256xf32, #tpu.memory_space<vmem>>, vector<1x1x1x256xf32>
    %239 = vector.shape_cast %238 : vector<1x1x1x256xf32> to vector<1x256xf32>
    %240 = vector.broadcast %63 : f32 to vector<1x256xf32>
    %241 = arith.mulf %240, %239 : vector<1x256xf32>
    %242 = arith.addf %237, %241 : vector<1x256xf32>
    %c0_116 = arith.constant 0 : index
    %c3_117 = arith.constant 3 : index
    %c0_118 = arith.constant 0 : index
    %c0_119 = arith.constant 0 : index
    %243 = vector.load %arg5[%c0_116, %c3_117, %c0_118, %c0_119] : memref<2x7x1x256xf32, #tpu.memory_space<vmem>>, vector<1x1x1x256xf32>
    %244 = vector.shape_cast %243 : vector<1x1x1x256xf32> to vector<1x256xf32>
    %245 = vector.broadcast %21 : f32 to vector<1x256xf32>
    %246 = arith.mulf %245, %244 : vector<1x256xf32>
    %247 = arith.addf %242, %246 : vector<1x256xf32>
    %c1_120 = arith.constant 1 : index
    %c3_121 = arith.constant 3 : index
    %c0_122 = arith.constant 0 : index
    %c0_123 = arith.constant 0 : index
    %248 = vector.load %arg5[%c1_120, %c3_121, %c0_122, %c0_123] : memref<2x7x1x256xf32, #tpu.memory_space<vmem>>, vector<1x1x1x256xf32>
    %249 = vector.shape_cast %248 : vector<1x1x1x256xf32> to vector<1x256xf32>
    %250 = vector.broadcast %70 : f32 to vector<1x256xf32>
    %251 = arith.mulf %250, %249 : vector<1x256xf32>
    %252 = arith.addf %247, %251 : vector<1x256xf32>
    %c0_124 = arith.constant 0 : index
    %c4_125 = arith.constant 4 : index
    %c0_126 = arith.constant 0 : index
    %c0_127 = arith.constant 0 : index
    %253 = vector.load %arg5[%c0_124, %c4_125, %c0_126, %c0_127] : memref<2x7x1x256xf32, #tpu.memory_space<vmem>>, vector<1x1x1x256xf32>
    %254 = vector.shape_cast %253 : vector<1x1x1x256xf32> to vector<1x256xf32>
    %255 = vector.broadcast %28 : f32 to vector<1x256xf32>
    %256 = arith.mulf %255, %254 : vector<1x256xf32>
    %257 = arith.addf %252, %256 : vector<1x256xf32>
    %c1_128 = arith.constant 1 : index
    %c4_129 = arith.constant 4 : index
    %c0_130 = arith.constant 0 : index
    %c0_131 = arith.constant 0 : index
    %258 = vector.load %arg5[%c1_128, %c4_129, %c0_130, %c0_131] : memref<2x7x1x256xf32, #tpu.memory_space<vmem>>, vector<1x1x1x256xf32>
    %259 = vector.shape_cast %258 : vector<1x1x1x256xf32> to vector<1x256xf32>
    %260 = vector.broadcast %77 : f32 to vector<1x256xf32>
    %261 = arith.mulf %260, %259 : vector<1x256xf32>
    %262 = arith.addf %257, %261 : vector<1x256xf32>
    %c0_132 = arith.constant 0 : index
    %c5_133 = arith.constant 5 : index
    %c0_134 = arith.constant 0 : index
    %c0_135 = arith.constant 0 : index
    %263 = vector.load %arg5[%c0_132, %c5_133, %c0_134, %c0_135] : memref<2x7x1x256xf32, #tpu.memory_space<vmem>>, vector<1x1x1x256xf32>
    %264 = vector.shape_cast %263 : vector<1x1x1x256xf32> to vector<1x256xf32>
    %265 = vector.broadcast %35 : f32 to vector<1x256xf32>
    %266 = arith.mulf %265, %264 : vector<1x256xf32>
    %267 = arith.addf %262, %266 : vector<1x256xf32>
    %c1_136 = arith.constant 1 : index
    %c5_137 = arith.constant 5 : index
    %c0_138 = arith.constant 0 : index
    %c0_139 = arith.constant 0 : index
    %268 = vector.load %arg5[%c1_136, %c5_137, %c0_138, %c0_139] : memref<2x7x1x256xf32, #tpu.memory_space<vmem>>, vector<1x1x1x256xf32>
    %269 = vector.shape_cast %268 : vector<1x1x1x256xf32> to vector<1x256xf32>
    %270 = vector.broadcast %84 : f32 to vector<1x256xf32>
    %271 = arith.mulf %270, %269 : vector<1x256xf32>
    %272 = arith.addf %267, %271 : vector<1x256xf32>
    %c0_140 = arith.constant 0 : index
    %c6_141 = arith.constant 6 : index
    %c0_142 = arith.constant 0 : index
    %c0_143 = arith.constant 0 : index
    %273 = vector.load %arg5[%c0_140, %c6_141, %c0_142, %c0_143] : memref<2x7x1x256xf32, #tpu.memory_space<vmem>>, vector<1x1x1x256xf32>
    %274 = vector.shape_cast %273 : vector<1x1x1x256xf32> to vector<1x256xf32>
    %275 = vector.broadcast %42 : f32 to vector<1x256xf32>
    %276 = arith.mulf %275, %274 : vector<1x256xf32>
    %277 = arith.addf %272, %276 : vector<1x256xf32>
    %c1_144 = arith.constant 1 : index
    %c6_145 = arith.constant 6 : index
    %c0_146 = arith.constant 0 : index
    %c0_147 = arith.constant 0 : index
    %278 = vector.load %arg5[%c1_144, %c6_145, %c0_146, %c0_147] : memref<2x7x1x256xf32, #tpu.memory_space<vmem>>, vector<1x1x1x256xf32>
    %279 = vector.shape_cast %278 : vector<1x1x1x256xf32> to vector<1x256xf32>
    %280 = vector.broadcast %91 : f32 to vector<1x256xf32>
    %281 = arith.mulf %280, %279 : vector<1x256xf32>
    %282 = arith.addf %277, %281 : vector<1x256xf32>
    %c3_i32 = arith.constant 3 : i32
    %283 = tpu.dynamic_rotate %282 by %c3_i32 dim 1 : vector<1x256xf32>, i32 -> vector<1x256xf32>
    %c3_i32_148 = arith.constant 3 : i32
    %284 = vector.broadcast %c3_i32_148 : i32 to vector<1x256xi32>
    %285 = arith.cmpi sge, %99, %284 : vector<1x256xi32>
    %c16_i32_149 = arith.constant 16 : i32
    %286 = vector.broadcast %c16_i32_149 : i32 to vector<1x256xi32>
    %287 = arith.cmpi slt, %99, %286 : vector<1x256xi32>
    %288 = arith.andi %285, %287 : vector<1x256xi1>
    %cst_150 = arith.constant 0.000000e+00 : f32
    %289 = vector.broadcast %cst_150 : f32 to vector<1x256xf32>
    %290 = arith.select %288, %283, %289 : vector<1x256xi1>, vector<1x256xf32>
    %291 = arith.addf %213, %290 : vector<1x256xf32>
    %c0_151 = arith.constant 0 : index
    %c0_152 = arith.constant 0 : index
    %c0_153 = arith.constant 0 : index
    %c0_154 = arith.constant 0 : index
    %292 = vector.load %arg5[%c0_151, %c0_152, %c0_153, %c0_154] : memref<2x7x1x256xf32, #tpu.memory_space<vmem>>, vector<1x1x1x256xf32>
    %293 = vector.shape_cast %292 : vector<1x1x1x256xf32> to vector<1x256xf32>
    %294 = vector.broadcast %1 : f32 to vector<1x256xf32>
    %295 = arith.mulf %294, %293 : vector<1x256xf32>
    %c1_155 = arith.constant 1 : index
    %c0_156 = arith.constant 0 : index
    %c0_157 = arith.constant 0 : index
    %c0_158 = arith.constant 0 : index
    %296 = vector.load %arg5[%c1_155, %c0_156, %c0_157, %c0_158] : memref<2x7x1x256xf32, #tpu.memory_space<vmem>>, vector<1x1x1x256xf32>
    %297 = vector.shape_cast %296 : vector<1x1x1x256xf32> to vector<1x256xf32>
    %298 = vector.broadcast %50 : f32 to vector<1x256xf32>
    %299 = arith.mulf %298, %297 : vector<1x256xf32>
    %300 = arith.addf %295, %299 : vector<1x256xf32>
    %c0_159 = arith.constant 0 : index
    %c1_160 = arith.constant 1 : index
    %c0_161 = arith.constant 0 : index
    %c0_162 = arith.constant 0 : index
    %301 = vector.load %arg5[%c0_159, %c1_160, %c0_161, %c0_162] : memref<2x7x1x256xf32, #tpu.memory_space<vmem>>, vector<1x1x1x256xf32>
    %302 = vector.shape_cast %301 : vector<1x1x1x256xf32> to vector<1x256xf32>
    %303 = vector.broadcast %8 : f32 to vector<1x256xf32>
    %304 = arith.mulf %303, %302 : vector<1x256xf32>
    %305 = arith.addf %300, %304 : vector<1x256xf32>
    %c1_163 = arith.constant 1 : index
    %c1_164 = arith.constant 1 : index
    %c0_165 = arith.constant 0 : index
    %c0_166 = arith.constant 0 : index
    %306 = vector.load %arg5[%c1_163, %c1_164, %c0_165, %c0_166] : memref<2x7x1x256xf32, #tpu.memory_space<vmem>>, vector<1x1x1x256xf32>
    %307 = vector.shape_cast %306 : vector<1x1x1x256xf32> to vector<1x256xf32>
    %308 = vector.broadcast %57 : f32 to vector<1x256xf32>
    %309 = arith.mulf %308, %307 : vector<1x256xf32>
    %310 = arith.addf %305, %309 : vector<1x256xf32>
    %c0_167 = arith.constant 0 : index
    %c2_168 = arith.constant 2 : index
    %c0_169 = arith.constant 0 : index
    %c0_170 = arith.constant 0 : index
    %311 = vector.load %arg5[%c0_167, %c2_168, %c0_169, %c0_170] : memref<2x7x1x256xf32, #tpu.memory_space<vmem>>, vector<1x1x1x256xf32>
    %312 = vector.shape_cast %311 : vector<1x1x1x256xf32> to vector<1x256xf32>
    %313 = vector.broadcast %15 : f32 to vector<1x256xf32>
    %314 = arith.mulf %313, %312 : vector<1x256xf32>
    %315 = arith.addf %310, %314 : vector<1x256xf32>
    %c1_171 = arith.constant 1 : index
    %c2_172 = arith.constant 2 : index
    %c0_173 = arith.constant 0 : index
    %c0_174 = arith.constant 0 : index
    %316 = vector.load %arg5[%c1_171, %c2_172, %c0_173, %c0_174] : memref<2x7x1x256xf32, #tpu.memory_space<vmem>>, vector<1x1x1x256xf32>
    %317 = vector.shape_cast %316 : vector<1x1x1x256xf32> to vector<1x256xf32>
    %318 = vector.broadcast %64 : f32 to vector<1x256xf32>
    %319 = arith.mulf %318, %317 : vector<1x256xf32>
    %320 = arith.addf %315, %319 : vector<1x256xf32>
    %c0_175 = arith.constant 0 : index
    %c3_176 = arith.constant 3 : index
    %c0_177 = arith.constant 0 : index
    %c0_178 = arith.constant 0 : index
    %321 = vector.load %arg5[%c0_175, %c3_176, %c0_177, %c0_178] : memref<2x7x1x256xf32, #tpu.memory_space<vmem>>, vector<1x1x1x256xf32>
    %322 = vector.shape_cast %321 : vector<1x1x1x256xf32> to vector<1x256xf32>
    %323 = vector.broadcast %22 : f32 to vector<1x256xf32>
    %324 = arith.mulf %323, %322 : vector<1x256xf32>
    %325 = arith.addf %320, %324 : vector<1x256xf32>
    %c1_179 = arith.constant 1 : index
    %c3_180 = arith.constant 3 : index
    %c0_181 = arith.constant 0 : index
    %c0_182 = arith.constant 0 : index
    %326 = vector.load %arg5[%c1_179, %c3_180, %c0_181, %c0_182] : memref<2x7x1x256xf32, #tpu.memory_space<vmem>>, vector<1x1x1x256xf32>
    %327 = vector.shape_cast %326 : vector<1x1x1x256xf32> to vector<1x256xf32>
    %328 = vector.broadcast %71 : f32 to vector<1x256xf32>
    %329 = arith.mulf %328, %327 : vector<1x256xf32>
    %330 = arith.addf %325, %329 : vector<1x256xf32>
    %c0_183 = arith.constant 0 : index
    %c4_184 = arith.constant 4 : index
    %c0_185 = arith.constant 0 : index
    %c0_186 = arith.constant 0 : index
    %331 = vector.load %arg5[%c0_183, %c4_184, %c0_185, %c0_186] : memref<2x7x1x256xf32, #tpu.memory_space<vmem>>, vector<1x1x1x256xf32>
    %332 = vector.shape_cast %331 : vector<1x1x1x256xf32> to vector<1x256xf32>
    %333 = vector.broadcast %29 : f32 to vector<1x256xf32>
    %334 = arith.mulf %333, %332 : vector<1x256xf32>
    %335 = arith.addf %330, %334 : vector<1x256xf32>
    %c1_187 = arith.constant 1 : index
    %c4_188 = arith.constant 4 : index
    %c0_189 = arith.constant 0 : index
    %c0_190 = arith.constant 0 : index
    %336 = vector.load %arg5[%c1_187, %c4_188, %c0_189, %c0_190] : memref<2x7x1x256xf32, #tpu.memory_space<vmem>>, vector<1x1x1x256xf32>
    %337 = vector.shape_cast %336 : vector<1x1x1x256xf32> to vector<1x256xf32>
    %338 = vector.broadcast %78 : f32 to vector<1x256xf32>
    %339 = arith.mulf %338, %337 : vector<1x256xf32>
    %340 = arith.addf %335, %339 : vector<1x256xf32>
    %c0_191 = arith.constant 0 : index
    %c5_192 = arith.constant 5 : index
    %c0_193 = arith.constant 0 : index
    %c0_194 = arith.constant 0 : index
    %341 = vector.load %arg5[%c0_191, %c5_192, %c0_193, %c0_194] : memref<2x7x1x256xf32, #tpu.memory_space<vmem>>, vector<1x1x1x256xf32>
    %342 = vector.shape_cast %341 : vector<1x1x1x256xf32> to vector<1x256xf32>
    %343 = vector.broadcast %36 : f32 to vector<1x256xf32>
    %344 = arith.mulf %343, %342 : vector<1x256xf32>
    %345 = arith.addf %340, %344 : vector<1x256xf32>
    %c1_195 = arith.constant 1 : index
    %c5_196 = arith.constant 5 : index
    %c0_197 = arith.constant 0 : index
    %c0_198 = arith.constant 0 : index
    %346 = vector.load %arg5[%c1_195, %c5_196, %c0_197, %c0_198] : memref<2x7x1x256xf32, #tpu.memory_space<vmem>>, vector<1x1x1x256xf32>
    %347 = vector.shape_cast %346 : vector<1x1x1x256xf32> to vector<1x256xf32>
    %348 = vector.broadcast %85 : f32 to vector<1x256xf32>
    %349 = arith.mulf %348, %347 : vector<1x256xf32>
    %350 = arith.addf %345, %349 : vector<1x256xf32>
    %c0_199 = arith.constant 0 : index
    %c6_200 = arith.constant 6 : index
    %c0_201 = arith.constant 0 : index
    %c0_202 = arith.constant 0 : index
    %351 = vector.load %arg5[%c0_199, %c6_200, %c0_201, %c0_202] : memref<2x7x1x256xf32, #tpu.memory_space<vmem>>, vector<1x1x1x256xf32>
    %352 = vector.shape_cast %351 : vector<1x1x1x256xf32> to vector<1x256xf32>
    %353 = vector.broadcast %43 : f32 to vector<1x256xf32>
    %354 = arith.mulf %353, %352 : vector<1x256xf32>
    %355 = arith.addf %350, %354 : vector<1x256xf32>
    %c1_203 = arith.constant 1 : index
    %c6_204 = arith.constant 6 : index
    %c0_205 = arith.constant 0 : index
    %c0_206 = arith.constant 0 : index
    %356 = vector.load %arg5[%c1_203, %c6_204, %c0_205, %c0_206] : memref<2x7x1x256xf32, #tpu.memory_space<vmem>>, vector<1x1x1x256xf32>
    %357 = vector.shape_cast %356 : vector<1x1x1x256xf32> to vector<1x256xf32>
    %358 = vector.broadcast %92 : f32 to vector<1x256xf32>
    %359 = arith.mulf %358, %357 : vector<1x256xf32>
    %360 = arith.addf %355, %359 : vector<1x256xf32>
    %c2_i32 = arith.constant 2 : i32
    %361 = tpu.dynamic_rotate %360 by %c2_i32 dim 1 : vector<1x256xf32>, i32 -> vector<1x256xf32>
    %c2_i32_207 = arith.constant 2 : i32
    %362 = vector.broadcast %c2_i32_207 : i32 to vector<1x256xi32>
    %363 = arith.cmpi sge, %99, %362 : vector<1x256xi32>
    %c16_i32_208 = arith.constant 16 : i32
    %364 = vector.broadcast %c16_i32_208 : i32 to vector<1x256xi32>
    %365 = arith.cmpi slt, %99, %364 : vector<1x256xi32>
    %366 = arith.andi %363, %365 : vector<1x256xi1>
    %cst_209 = arith.constant 0.000000e+00 : f32
    %367 = vector.broadcast %cst_209 : f32 to vector<1x256xf32>
    %368 = arith.select %366, %361, %367 : vector<1x256xi1>, vector<1x256xf32>
    %369 = arith.addf %291, %368 : vector<1x256xf32>
    %c0_210 = arith.constant 0 : index
    %c0_211 = arith.constant 0 : index
    %c0_212 = arith.constant 0 : index
    %c0_213 = arith.constant 0 : index
    %370 = vector.load %arg5[%c0_210, %c0_211, %c0_212, %c0_213] : memref<2x7x1x256xf32, #tpu.memory_space<vmem>>, vector<1x1x1x256xf32>
    %371 = vector.shape_cast %370 : vector<1x1x1x256xf32> to vector<1x256xf32>
    %372 = vector.broadcast %2 : f32 to vector<1x256xf32>
    %373 = arith.mulf %372, %371 : vector<1x256xf32>
    %c1_214 = arith.constant 1 : index
    %c0_215 = arith.constant 0 : index
    %c0_216 = arith.constant 0 : index
    %c0_217 = arith.constant 0 : index
    %374 = vector.load %arg5[%c1_214, %c0_215, %c0_216, %c0_217] : memref<2x7x1x256xf32, #tpu.memory_space<vmem>>, vector<1x1x1x256xf32>
    %375 = vector.shape_cast %374 : vector<1x1x1x256xf32> to vector<1x256xf32>
    %376 = vector.broadcast %51 : f32 to vector<1x256xf32>
    %377 = arith.mulf %376, %375 : vector<1x256xf32>
    %378 = arith.addf %373, %377 : vector<1x256xf32>
    %c0_218 = arith.constant 0 : index
    %c1_219 = arith.constant 1 : index
    %c0_220 = arith.constant 0 : index
    %c0_221 = arith.constant 0 : index
    %379 = vector.load %arg5[%c0_218, %c1_219, %c0_220, %c0_221] : memref<2x7x1x256xf32, #tpu.memory_space<vmem>>, vector<1x1x1x256xf32>
    %380 = vector.shape_cast %379 : vector<1x1x1x256xf32> to vector<1x256xf32>
    %381 = vector.broadcast %9 : f32 to vector<1x256xf32>
    %382 = arith.mulf %381, %380 : vector<1x256xf32>
    %383 = arith.addf %378, %382 : vector<1x256xf32>
    %c1_222 = arith.constant 1 : index
    %c1_223 = arith.constant 1 : index
    %c0_224 = arith.constant 0 : index
    %c0_225 = arith.constant 0 : index
    %384 = vector.load %arg5[%c1_222, %c1_223, %c0_224, %c0_225] : memref<2x7x1x256xf32, #tpu.memory_space<vmem>>, vector<1x1x1x256xf32>
    %385 = vector.shape_cast %384 : vector<1x1x1x256xf32> to vector<1x256xf32>
    %386 = vector.broadcast %58 : f32 to vector<1x256xf32>
    %387 = arith.mulf %386, %385 : vector<1x256xf32>
    %388 = arith.addf %383, %387 : vector<1x256xf32>
    %c0_226 = arith.constant 0 : index
    %c2_227 = arith.constant 2 : index
    %c0_228 = arith.constant 0 : index
    %c0_229 = arith.constant 0 : index
    %389 = vector.load %arg5[%c0_226, %c2_227, %c0_228, %c0_229] : memref<2x7x1x256xf32, #tpu.memory_space<vmem>>, vector<1x1x1x256xf32>
    %390 = vector.shape_cast %389 : vector<1x1x1x256xf32> to vector<1x256xf32>
    %391 = vector.broadcast %16 : f32 to vector<1x256xf32>
    %392 = arith.mulf %391, %390 : vector<1x256xf32>
    %393 = arith.addf %388, %392 : vector<1x256xf32>
    %c1_230 = arith.constant 1 : index
    %c2_231 = arith.constant 2 : index
    %c0_232 = arith.constant 0 : index
    %c0_233 = arith.constant 0 : index
    %394 = vector.load %arg5[%c1_230, %c2_231, %c0_232, %c0_233] : memref<2x7x1x256xf32, #tpu.memory_space<vmem>>, vector<1x1x1x256xf32>
    %395 = vector.shape_cast %394 : vector<1x1x1x256xf32> to vector<1x256xf32>
    %396 = vector.broadcast %65 : f32 to vector<1x256xf32>
    %397 = arith.mulf %396, %395 : vector<1x256xf32>
    %398 = arith.addf %393, %397 : vector<1x256xf32>
    %c0_234 = arith.constant 0 : index
    %c3_235 = arith.constant 3 : index
    %c0_236 = arith.constant 0 : index
    %c0_237 = arith.constant 0 : index
    %399 = vector.load %arg5[%c0_234, %c3_235, %c0_236, %c0_237] : memref<2x7x1x256xf32, #tpu.memory_space<vmem>>, vector<1x1x1x256xf32>
    %400 = vector.shape_cast %399 : vector<1x1x1x256xf32> to vector<1x256xf32>
    %401 = vector.broadcast %23 : f32 to vector<1x256xf32>
    %402 = arith.mulf %401, %400 : vector<1x256xf32>
    %403 = arith.addf %398, %402 : vector<1x256xf32>
    %c1_238 = arith.constant 1 : index
    %c3_239 = arith.constant 3 : index
    %c0_240 = arith.constant 0 : index
    %c0_241 = arith.constant 0 : index
    %404 = vector.load %arg5[%c1_238, %c3_239, %c0_240, %c0_241] : memref<2x7x1x256xf32, #tpu.memory_space<vmem>>, vector<1x1x1x256xf32>
    %405 = vector.shape_cast %404 : vector<1x1x1x256xf32> to vector<1x256xf32>
    %406 = vector.broadcast %72 : f32 to vector<1x256xf32>
    %407 = arith.mulf %406, %405 : vector<1x256xf32>
    %408 = arith.addf %403, %407 : vector<1x256xf32>
    %c0_242 = arith.constant 0 : index
    %c4_243 = arith.constant 4 : index
    %c0_244 = arith.constant 0 : index
    %c0_245 = arith.constant 0 : index
    %409 = vector.load %arg5[%c0_242, %c4_243, %c0_244, %c0_245] : memref<2x7x1x256xf32, #tpu.memory_space<vmem>>, vector<1x1x1x256xf32>
    %410 = vector.shape_cast %409 : vector<1x1x1x256xf32> to vector<1x256xf32>
    %411 = vector.broadcast %30 : f32 to vector<1x256xf32>
    %412 = arith.mulf %411, %410 : vector<1x256xf32>
    %413 = arith.addf %408, %412 : vector<1x256xf32>
    %c1_246 = arith.constant 1 : index
    %c4_247 = arith.constant 4 : index
    %c0_248 = arith.constant 0 : index
    %c0_249 = arith.constant 0 : index
    %414 = vector.load %arg5[%c1_246, %c4_247, %c0_248, %c0_249] : memref<2x7x1x256xf32, #tpu.memory_space<vmem>>, vector<1x1x1x256xf32>
    %415 = vector.shape_cast %414 : vector<1x1x1x256xf32> to vector<1x256xf32>
    %416 = vector.broadcast %79 : f32 to vector<1x256xf32>
    %417 = arith.mulf %416, %415 : vector<1x256xf32>
    %418 = arith.addf %413, %417 : vector<1x256xf32>
    %c0_250 = arith.constant 0 : index
    %c5_251 = arith.constant 5 : index
    %c0_252 = arith.constant 0 : index
    %c0_253 = arith.constant 0 : index
    %419 = vector.load %arg5[%c0_250, %c5_251, %c0_252, %c0_253] : memref<2x7x1x256xf32, #tpu.memory_space<vmem>>, vector<1x1x1x256xf32>
    %420 = vector.shape_cast %419 : vector<1x1x1x256xf32> to vector<1x256xf32>
    %421 = vector.broadcast %37 : f32 to vector<1x256xf32>
    %422 = arith.mulf %421, %420 : vector<1x256xf32>
    %423 = arith.addf %418, %422 : vector<1x256xf32>
    %c1_254 = arith.constant 1 : index
    %c5_255 = arith.constant 5 : index
    %c0_256 = arith.constant 0 : index
    %c0_257 = arith.constant 0 : index
    %424 = vector.load %arg5[%c1_254, %c5_255, %c0_256, %c0_257] : memref<2x7x1x256xf32, #tpu.memory_space<vmem>>, vector<1x1x1x256xf32>
    %425 = vector.shape_cast %424 : vector<1x1x1x256xf32> to vector<1x256xf32>
    %426 = vector.broadcast %86 : f32 to vector<1x256xf32>
    %427 = arith.mulf %426, %425 : vector<1x256xf32>
    %428 = arith.addf %423, %427 : vector<1x256xf32>
    %c0_258 = arith.constant 0 : index
    %c6_259 = arith.constant 6 : index
    %c0_260 = arith.constant 0 : index
    %c0_261 = arith.constant 0 : index
    %429 = vector.load %arg5[%c0_258, %c6_259, %c0_260, %c0_261] : memref<2x7x1x256xf32, #tpu.memory_space<vmem>>, vector<1x1x1x256xf32>
    %430 = vector.shape_cast %429 : vector<1x1x1x256xf32> to vector<1x256xf32>
    %431 = vector.broadcast %44 : f32 to vector<1x256xf32>
    %432 = arith.mulf %431, %430 : vector<1x256xf32>
    %433 = arith.addf %428, %432 : vector<1x256xf32>
    %c1_262 = arith.constant 1 : index
    %c6_263 = arith.constant 6 : index
    %c0_264 = arith.constant 0 : index
    %c0_265 = arith.constant 0 : index
    %434 = vector.load %arg5[%c1_262, %c6_263, %c0_264, %c0_265] : memref<2x7x1x256xf32, #tpu.memory_space<vmem>>, vector<1x1x1x256xf32>
    %435 = vector.shape_cast %434 : vector<1x1x1x256xf32> to vector<1x256xf32>
    %436 = vector.broadcast %93 : f32 to vector<1x256xf32>
    %437 = arith.mulf %436, %435 : vector<1x256xf32>
    %438 = arith.addf %433, %437 : vector<1x256xf32>
    %c1_i32 = arith.constant 1 : i32
    %439 = tpu.dynamic_rotate %438 by %c1_i32 dim 1 : vector<1x256xf32>, i32 -> vector<1x256xf32>
    %c1_i32_266 = arith.constant 1 : i32
    %440 = vector.broadcast %c1_i32_266 : i32 to vector<1x256xi32>
    %441 = arith.cmpi sge, %99, %440 : vector<1x256xi32>
    %c16_i32_267 = arith.constant 16 : i32
    %442 = vector.broadcast %c16_i32_267 : i32 to vector<1x256xi32>
    %443 = arith.cmpi slt, %99, %442 : vector<1x256xi32>
    %444 = arith.andi %441, %443 : vector<1x256xi1>
    %cst_268 = arith.constant 0.000000e+00 : f32
    %445 = vector.broadcast %cst_268 : f32 to vector<1x256xf32>
    %446 = arith.select %444, %439, %445 : vector<1x256xi1>, vector<1x256xf32>
    %447 = arith.addf %369, %446 : vector<1x256xf32>
    %c0_269 = arith.constant 0 : index
    %c0_270 = arith.constant 0 : index
    %c0_271 = arith.constant 0 : index
    %c0_272 = arith.constant 0 : index
    %448 = vector.load %arg5[%c0_269, %c0_270, %c0_271, %c0_272] : memref<2x7x1x256xf32, #tpu.memory_space<vmem>>, vector<1x1x1x256xf32>
    %449 = vector.shape_cast %448 : vector<1x1x1x256xf32> to vector<1x256xf32>
    %450 = vector.broadcast %3 : f32 to vector<1x256xf32>
    %451 = arith.mulf %450, %449 : vector<1x256xf32>
    %c1_273 = arith.constant 1 : index
    %c0_274 = arith.constant 0 : index
    %c0_275 = arith.constant 0 : index
    %c0_276 = arith.constant 0 : index
    %452 = vector.load %arg5[%c1_273, %c0_274, %c0_275, %c0_276] : memref<2x7x1x256xf32, #tpu.memory_space<vmem>>, vector<1x1x1x256xf32>
    %453 = vector.shape_cast %452 : vector<1x1x1x256xf32> to vector<1x256xf32>
    %454 = vector.broadcast %52 : f32 to vector<1x256xf32>
    %455 = arith.mulf %454, %453 : vector<1x256xf32>
    %456 = arith.addf %451, %455 : vector<1x256xf32>
    %c0_277 = arith.constant 0 : index
    %c1_278 = arith.constant 1 : index
    %c0_279 = arith.constant 0 : index
    %c0_280 = arith.constant 0 : index
    %457 = vector.load %arg5[%c0_277, %c1_278, %c0_279, %c0_280] : memref<2x7x1x256xf32, #tpu.memory_space<vmem>>, vector<1x1x1x256xf32>
    %458 = vector.shape_cast %457 : vector<1x1x1x256xf32> to vector<1x256xf32>
    %459 = vector.broadcast %10 : f32 to vector<1x256xf32>
    %460 = arith.mulf %459, %458 : vector<1x256xf32>
    %461 = arith.addf %456, %460 : vector<1x256xf32>
    %c1_281 = arith.constant 1 : index
    %c1_282 = arith.constant 1 : index
    %c0_283 = arith.constant 0 : index
    %c0_284 = arith.constant 0 : index
    %462 = vector.load %arg5[%c1_281, %c1_282, %c0_283, %c0_284] : memref<2x7x1x256xf32, #tpu.memory_space<vmem>>, vector<1x1x1x256xf32>
    %463 = vector.shape_cast %462 : vector<1x1x1x256xf32> to vector<1x256xf32>
    %464 = vector.broadcast %59 : f32 to vector<1x256xf32>
    %465 = arith.mulf %464, %463 : vector<1x256xf32>
    %466 = arith.addf %461, %465 : vector<1x256xf32>
    %c0_285 = arith.constant 0 : index
    %c2_286 = arith.constant 2 : index
    %c0_287 = arith.constant 0 : index
    %c0_288 = arith.constant 0 : index
    %467 = vector.load %arg5[%c0_285, %c2_286, %c0_287, %c0_288] : memref<2x7x1x256xf32, #tpu.memory_space<vmem>>, vector<1x1x1x256xf32>
    %468 = vector.shape_cast %467 : vector<1x1x1x256xf32> to vector<1x256xf32>
    %469 = vector.broadcast %17 : f32 to vector<1x256xf32>
    %470 = arith.mulf %469, %468 : vector<1x256xf32>
    %471 = arith.addf %466, %470 : vector<1x256xf32>
    %c1_289 = arith.constant 1 : index
    %c2_290 = arith.constant 2 : index
    %c0_291 = arith.constant 0 : index
    %c0_292 = arith.constant 0 : index
    %472 = vector.load %arg5[%c1_289, %c2_290, %c0_291, %c0_292] : memref<2x7x1x256xf32, #tpu.memory_space<vmem>>, vector<1x1x1x256xf32>
    %473 = vector.shape_cast %472 : vector<1x1x1x256xf32> to vector<1x256xf32>
    %474 = vector.broadcast %66 : f32 to vector<1x256xf32>
    %475 = arith.mulf %474, %473 : vector<1x256xf32>
    %476 = arith.addf %471, %475 : vector<1x256xf32>
    %c0_293 = arith.constant 0 : index
    %c3_294 = arith.constant 3 : index
    %c0_295 = arith.constant 0 : index
    %c0_296 = arith.constant 0 : index
    %477 = vector.load %arg5[%c0_293, %c3_294, %c0_295, %c0_296] : memref<2x7x1x256xf32, #tpu.memory_space<vmem>>, vector<1x1x1x256xf32>
    %478 = vector.shape_cast %477 : vector<1x1x1x256xf32> to vector<1x256xf32>
    %479 = vector.broadcast %24 : f32 to vector<1x256xf32>
    %480 = arith.mulf %479, %478 : vector<1x256xf32>
    %481 = arith.addf %476, %480 : vector<1x256xf32>
    %c1_297 = arith.constant 1 : index
    %c3_298 = arith.constant 3 : index
    %c0_299 = arith.constant 0 : index
    %c0_300 = arith.constant 0 : index
    %482 = vector.load %arg5[%c1_297, %c3_298, %c0_299, %c0_300] : memref<2x7x1x256xf32, #tpu.memory_space<vmem>>, vector<1x1x1x256xf32>
    %483 = vector.shape_cast %482 : vector<1x1x1x256xf32> to vector<1x256xf32>
    %484 = vector.broadcast %73 : f32 to vector<1x256xf32>
    %485 = arith.mulf %484, %483 : vector<1x256xf32>
    %486 = arith.addf %481, %485 : vector<1x256xf32>
    %c0_301 = arith.constant 0 : index
    %c4_302 = arith.constant 4 : index
    %c0_303 = arith.constant 0 : index
    %c0_304 = arith.constant 0 : index
    %487 = vector.load %arg5[%c0_301, %c4_302, %c0_303, %c0_304] : memref<2x7x1x256xf32, #tpu.memory_space<vmem>>, vector<1x1x1x256xf32>
    %488 = vector.shape_cast %487 : vector<1x1x1x256xf32> to vector<1x256xf32>
    %489 = vector.broadcast %31 : f32 to vector<1x256xf32>
    %490 = arith.mulf %489, %488 : vector<1x256xf32>
    %491 = arith.addf %486, %490 : vector<1x256xf32>
    %c1_305 = arith.constant 1 : index
    %c4_306 = arith.constant 4 : index
    %c0_307 = arith.constant 0 : index
    %c0_308 = arith.constant 0 : index
    %492 = vector.load %arg5[%c1_305, %c4_306, %c0_307, %c0_308] : memref<2x7x1x256xf32, #tpu.memory_space<vmem>>, vector<1x1x1x256xf32>
    %493 = vector.shape_cast %492 : vector<1x1x1x256xf32> to vector<1x256xf32>
    %494 = vector.broadcast %80 : f32 to vector<1x256xf32>
    %495 = arith.mulf %494, %493 : vector<1x256xf32>
    %496 = arith.addf %491, %495 : vector<1x256xf32>
    %c0_309 = arith.constant 0 : index
    %c5_310 = arith.constant 5 : index
    %c0_311 = arith.constant 0 : index
    %c0_312 = arith.constant 0 : index
    %497 = vector.load %arg5[%c0_309, %c5_310, %c0_311, %c0_312] : memref<2x7x1x256xf32, #tpu.memory_space<vmem>>, vector<1x1x1x256xf32>
    %498 = vector.shape_cast %497 : vector<1x1x1x256xf32> to vector<1x256xf32>
    %499 = vector.broadcast %38 : f32 to vector<1x256xf32>
    %500 = arith.mulf %499, %498 : vector<1x256xf32>
    %501 = arith.addf %496, %500 : vector<1x256xf32>
    %c1_313 = arith.constant 1 : index
    %c5_314 = arith.constant 5 : index
    %c0_315 = arith.constant 0 : index
    %c0_316 = arith.constant 0 : index
    %502 = vector.load %arg5[%c1_313, %c5_314, %c0_315, %c0_316] : memref<2x7x1x256xf32, #tpu.memory_space<vmem>>, vector<1x1x1x256xf32>
    %503 = vector.shape_cast %502 : vector<1x1x1x256xf32> to vector<1x256xf32>
    %504 = vector.broadcast %87 : f32 to vector<1x256xf32>
    %505 = arith.mulf %504, %503 : vector<1x256xf32>
    %506 = arith.addf %501, %505 : vector<1x256xf32>
    %c0_317 = arith.constant 0 : index
    %c6_318 = arith.constant 6 : index
    %c0_319 = arith.constant 0 : index
    %c0_320 = arith.constant 0 : index
    %507 = vector.load %arg5[%c0_317, %c6_318, %c0_319, %c0_320] : memref<2x7x1x256xf32, #tpu.memory_space<vmem>>, vector<1x1x1x256xf32>
    %508 = vector.shape_cast %507 : vector<1x1x1x256xf32> to vector<1x256xf32>
    %509 = vector.broadcast %45 : f32 to vector<1x256xf32>
    %510 = arith.mulf %509, %508 : vector<1x256xf32>
    %511 = arith.addf %506, %510 : vector<1x256xf32>
    %c1_321 = arith.constant 1 : index
    %c6_322 = arith.constant 6 : index
    %c0_323 = arith.constant 0 : index
    %c0_324 = arith.constant 0 : index
    %512 = vector.load %arg5[%c1_321, %c6_322, %c0_323, %c0_324] : memref<2x7x1x256xf32, #tpu.memory_space<vmem>>, vector<1x1x1x256xf32>
    %513 = vector.shape_cast %512 : vector<1x1x1x256xf32> to vector<1x256xf32>
    %514 = vector.broadcast %94 : f32 to vector<1x256xf32>
    %515 = arith.mulf %514, %513 : vector<1x256xf32>
    %516 = arith.addf %511, %515 : vector<1x256xf32>
    %517 = arith.addf %447, %516 : vector<1x256xf32>
    %c0_325 = arith.constant 0 : index
    %c0_326 = arith.constant 0 : index
    %c0_327 = arith.constant 0 : index
    %c0_328 = arith.constant 0 : index
    %518 = vector.load %arg5[%c0_325, %c0_326, %c0_327, %c0_328] : memref<2x7x1x256xf32, #tpu.memory_space<vmem>>, vector<1x1x1x256xf32>
    %519 = vector.shape_cast %518 : vector<1x1x1x256xf32> to vector<1x256xf32>
    %520 = vector.broadcast %4 : f32 to vector<1x256xf32>
    %521 = arith.mulf %520, %519 : vector<1x256xf32>
    %c1_329 = arith.constant 1 : index
    %c0_330 = arith.constant 0 : index
    %c0_331 = arith.constant 0 : index
    %c0_332 = arith.constant 0 : index
    %522 = vector.load %arg5[%c1_329, %c0_330, %c0_331, %c0_332] : memref<2x7x1x256xf32, #tpu.memory_space<vmem>>, vector<1x1x1x256xf32>
    %523 = vector.shape_cast %522 : vector<1x1x1x256xf32> to vector<1x256xf32>
    %524 = vector.broadcast %53 : f32 to vector<1x256xf32>
    %525 = arith.mulf %524, %523 : vector<1x256xf32>
    %526 = arith.addf %521, %525 : vector<1x256xf32>
    %c0_333 = arith.constant 0 : index
    %c1_334 = arith.constant 1 : index
    %c0_335 = arith.constant 0 : index
    %c0_336 = arith.constant 0 : index
    %527 = vector.load %arg5[%c0_333, %c1_334, %c0_335, %c0_336] : memref<2x7x1x256xf32, #tpu.memory_space<vmem>>, vector<1x1x1x256xf32>
    %528 = vector.shape_cast %527 : vector<1x1x1x256xf32> to vector<1x256xf32>
    %529 = vector.broadcast %11 : f32 to vector<1x256xf32>
    %530 = arith.mulf %529, %528 : vector<1x256xf32>
    %531 = arith.addf %526, %530 : vector<1x256xf32>
    %c1_337 = arith.constant 1 : index
    %c1_338 = arith.constant 1 : index
    %c0_339 = arith.constant 0 : index
    %c0_340 = arith.constant 0 : index
    %532 = vector.load %arg5[%c1_337, %c1_338, %c0_339, %c0_340] : memref<2x7x1x256xf32, #tpu.memory_space<vmem>>, vector<1x1x1x256xf32>
    %533 = vector.shape_cast %532 : vector<1x1x1x256xf32> to vector<1x256xf32>
    %534 = vector.broadcast %60 : f32 to vector<1x256xf32>
    %535 = arith.mulf %534, %533 : vector<1x256xf32>
    %536 = arith.addf %531, %535 : vector<1x256xf32>
    %c0_341 = arith.constant 0 : index
    %c2_342 = arith.constant 2 : index
    %c0_343 = arith.constant 0 : index
    %c0_344 = arith.constant 0 : index
    %537 = vector.load %arg5[%c0_341, %c2_342, %c0_343, %c0_344] : memref<2x7x1x256xf32, #tpu.memory_space<vmem>>, vector<1x1x1x256xf32>
    %538 = vector.shape_cast %537 : vector<1x1x1x256xf32> to vector<1x256xf32>
    %539 = vector.broadcast %18 : f32 to vector<1x256xf32>
    %540 = arith.mulf %539, %538 : vector<1x256xf32>
    %541 = arith.addf %536, %540 : vector<1x256xf32>
    %c1_345 = arith.constant 1 : index
    %c2_346 = arith.constant 2 : index
    %c0_347 = arith.constant 0 : index
    %c0_348 = arith.constant 0 : index
    %542 = vector.load %arg5[%c1_345, %c2_346, %c0_347, %c0_348] : memref<2x7x1x256xf32, #tpu.memory_space<vmem>>, vector<1x1x1x256xf32>
    %543 = vector.shape_cast %542 : vector<1x1x1x256xf32> to vector<1x256xf32>
    %544 = vector.broadcast %67 : f32 to vector<1x256xf32>
    %545 = arith.mulf %544, %543 : vector<1x256xf32>
    %546 = arith.addf %541, %545 : vector<1x256xf32>
    %c0_349 = arith.constant 0 : index
    %c3_350 = arith.constant 3 : index
    %c0_351 = arith.constant 0 : index
    %c0_352 = arith.constant 0 : index
    %547 = vector.load %arg5[%c0_349, %c3_350, %c0_351, %c0_352] : memref<2x7x1x256xf32, #tpu.memory_space<vmem>>, vector<1x1x1x256xf32>
    %548 = vector.shape_cast %547 : vector<1x1x1x256xf32> to vector<1x256xf32>
    %549 = vector.broadcast %25 : f32 to vector<1x256xf32>
    %550 = arith.mulf %549, %548 : vector<1x256xf32>
    %551 = arith.addf %546, %550 : vector<1x256xf32>
    %c1_353 = arith.constant 1 : index
    %c3_354 = arith.constant 3 : index
    %c0_355 = arith.constant 0 : index
    %c0_356 = arith.constant 0 : index
    %552 = vector.load %arg5[%c1_353, %c3_354, %c0_355, %c0_356] : memref<2x7x1x256xf32, #tpu.memory_space<vmem>>, vector<1x1x1x256xf32>
    %553 = vector.shape_cast %552 : vector<1x1x1x256xf32> to vector<1x256xf32>
    %554 = vector.broadcast %74 : f32 to vector<1x256xf32>
    %555 = arith.mulf %554, %553 : vector<1x256xf32>
    %556 = arith.addf %551, %555 : vector<1x256xf32>
    %c0_357 = arith.constant 0 : index
    %c4_358 = arith.constant 4 : index
    %c0_359 = arith.constant 0 : index
    %c0_360 = arith.constant 0 : index
    %557 = vector.load %arg5[%c0_357, %c4_358, %c0_359, %c0_360] : memref<2x7x1x256xf32, #tpu.memory_space<vmem>>, vector<1x1x1x256xf32>
    %558 = vector.shape_cast %557 : vector<1x1x1x256xf32> to vector<1x256xf32>
    %559 = vector.broadcast %32 : f32 to vector<1x256xf32>
    %560 = arith.mulf %559, %558 : vector<1x256xf32>
    %561 = arith.addf %556, %560 : vector<1x256xf32>
    %c1_361 = arith.constant 1 : index
    %c4_362 = arith.constant 4 : index
    %c0_363 = arith.constant 0 : index
    %c0_364 = arith.constant 0 : index
    %562 = vector.load %arg5[%c1_361, %c4_362, %c0_363, %c0_364] : memref<2x7x1x256xf32, #tpu.memory_space<vmem>>, vector<1x1x1x256xf32>
    %563 = vector.shape_cast %562 : vector<1x1x1x256xf32> to vector<1x256xf32>
    %564 = vector.broadcast %81 : f32 to vector<1x256xf32>
    %565 = arith.mulf %564, %563 : vector<1x256xf32>
    %566 = arith.addf %561, %565 : vector<1x256xf32>
    %c0_365 = arith.constant 0 : index
    %c5_366 = arith.constant 5 : index
    %c0_367 = arith.constant 0 : index
    %c0_368 = arith.constant 0 : index
    %567 = vector.load %arg5[%c0_365, %c5_366, %c0_367, %c0_368] : memref<2x7x1x256xf32, #tpu.memory_space<vmem>>, vector<1x1x1x256xf32>
    %568 = vector.shape_cast %567 : vector<1x1x1x256xf32> to vector<1x256xf32>
    %569 = vector.broadcast %39 : f32 to vector<1x256xf32>
    %570 = arith.mulf %569, %568 : vector<1x256xf32>
    %571 = arith.addf %566, %570 : vector<1x256xf32>
    %c1_369 = arith.constant 1 : index
    %c5_370 = arith.constant 5 : index
    %c0_371 = arith.constant 0 : index
    %c0_372 = arith.constant 0 : index
    %572 = vector.load %arg5[%c1_369, %c5_370, %c0_371, %c0_372] : memref<2x7x1x256xf32, #tpu.memory_space<vmem>>, vector<1x1x1x256xf32>
    %573 = vector.shape_cast %572 : vector<1x1x1x256xf32> to vector<1x256xf32>
    %574 = vector.broadcast %88 : f32 to vector<1x256xf32>
    %575 = arith.mulf %574, %573 : vector<1x256xf32>
    %576 = arith.addf %571, %575 : vector<1x256xf32>
    %c0_373 = arith.constant 0 : index
    %c6_374 = arith.constant 6 : index
    %c0_375 = arith.constant 0 : index
    %c0_376 = arith.constant 0 : index
    %577 = vector.load %arg5[%c0_373, %c6_374, %c0_375, %c0_376] : memref<2x7x1x256xf32, #tpu.memory_space<vmem>>, vector<1x1x1x256xf32>
    %578 = vector.shape_cast %577 : vector<1x1x1x256xf32> to vector<1x256xf32>
    %579 = vector.broadcast %46 : f32 to vector<1x256xf32>
    %580 = arith.mulf %579, %578 : vector<1x256xf32>
    %581 = arith.addf %576, %580 : vector<1x256xf32>
    %c1_377 = arith.constant 1 : index
    %c6_378 = arith.constant 6 : index
    %c0_379 = arith.constant 0 : index
    %c0_380 = arith.constant 0 : index
    %582 = vector.load %arg5[%c1_377, %c6_378, %c0_379, %c0_380] : memref<2x7x1x256xf32, #tpu.memory_space<vmem>>, vector<1x1x1x256xf32>
    %583 = vector.shape_cast %582 : vector<1x1x1x256xf32> to vector<1x256xf32>
    %584 = vector.broadcast %95 : f32 to vector<1x256xf32>
    %585 = arith.mulf %584, %583 : vector<1x256xf32>
    %586 = arith.addf %581, %585 : vector<1x256xf32>
    %c255_i32 = arith.constant 255 : i32
    %587 = tpu.dynamic_rotate %586 by %c255_i32 dim 1 : vector<1x256xf32>, i32 -> vector<1x256xf32>
    %c0_i32_381 = arith.constant 0 : i32
    %588 = vector.broadcast %c0_i32_381 : i32 to vector<1x256xi32>
    %589 = arith.cmpi sge, %99, %588 : vector<1x256xi32>
    %c15_i32 = arith.constant 15 : i32
    %590 = vector.broadcast %c15_i32 : i32 to vector<1x256xi32>
    %591 = arith.cmpi slt, %99, %590 : vector<1x256xi32>
    %592 = arith.andi %589, %591 : vector<1x256xi1>
    %cst_382 = arith.constant 0.000000e+00 : f32
    %593 = vector.broadcast %cst_382 : f32 to vector<1x256xf32>
    %594 = arith.select %592, %587, %593 : vector<1x256xi1>, vector<1x256xf32>
    %595 = arith.addf %517, %594 : vector<1x256xf32>
    %c0_383 = arith.constant 0 : index
    %c0_384 = arith.constant 0 : index
    %c0_385 = arith.constant 0 : index
    %c0_386 = arith.constant 0 : index
    %596 = vector.load %arg5[%c0_383, %c0_384, %c0_385, %c0_386] : memref<2x7x1x256xf32, #tpu.memory_space<vmem>>, vector<1x1x1x256xf32>
    %597 = vector.shape_cast %596 : vector<1x1x1x256xf32> to vector<1x256xf32>
    %598 = vector.broadcast %5 : f32 to vector<1x256xf32>
    %599 = arith.mulf %598, %597 : vector<1x256xf32>
    %c1_387 = arith.constant 1 : index
    %c0_388 = arith.constant 0 : index
    %c0_389 = arith.constant 0 : index
    %c0_390 = arith.constant 0 : index
    %600 = vector.load %arg5[%c1_387, %c0_388, %c0_389, %c0_390] : memref<2x7x1x256xf32, #tpu.memory_space<vmem>>, vector<1x1x1x256xf32>
    %601 = vector.shape_cast %600 : vector<1x1x1x256xf32> to vector<1x256xf32>
    %602 = vector.broadcast %54 : f32 to vector<1x256xf32>
    %603 = arith.mulf %602, %601 : vector<1x256xf32>
    %604 = arith.addf %599, %603 : vector<1x256xf32>
    %c0_391 = arith.constant 0 : index
    %c1_392 = arith.constant 1 : index
    %c0_393 = arith.constant 0 : index
    %c0_394 = arith.constant 0 : index
    %605 = vector.load %arg5[%c0_391, %c1_392, %c0_393, %c0_394] : memref<2x7x1x256xf32, #tpu.memory_space<vmem>>, vector<1x1x1x256xf32>
    %606 = vector.shape_cast %605 : vector<1x1x1x256xf32> to vector<1x256xf32>
    %607 = vector.broadcast %12 : f32 to vector<1x256xf32>
    %608 = arith.mulf %607, %606 : vector<1x256xf32>
    %609 = arith.addf %604, %608 : vector<1x256xf32>
    %c1_395 = arith.constant 1 : index
    %c1_396 = arith.constant 1 : index
    %c0_397 = arith.constant 0 : index
    %c0_398 = arith.constant 0 : index
    %610 = vector.load %arg5[%c1_395, %c1_396, %c0_397, %c0_398] : memref<2x7x1x256xf32, #tpu.memory_space<vmem>>, vector<1x1x1x256xf32>
    %611 = vector.shape_cast %610 : vector<1x1x1x256xf32> to vector<1x256xf32>
    %612 = vector.broadcast %61 : f32 to vector<1x256xf32>
    %613 = arith.mulf %612, %611 : vector<1x256xf32>
    %614 = arith.addf %609, %613 : vector<1x256xf32>
    %c0_399 = arith.constant 0 : index
    %c2_400 = arith.constant 2 : index
    %c0_401 = arith.constant 0 : index
    %c0_402 = arith.constant 0 : index
    %615 = vector.load %arg5[%c0_399, %c2_400, %c0_401, %c0_402] : memref<2x7x1x256xf32, #tpu.memory_space<vmem>>, vector<1x1x1x256xf32>
    %616 = vector.shape_cast %615 : vector<1x1x1x256xf32> to vector<1x256xf32>
    %617 = vector.broadcast %19 : f32 to vector<1x256xf32>
    %618 = arith.mulf %617, %616 : vector<1x256xf32>
    %619 = arith.addf %614, %618 : vector<1x256xf32>
    %c1_403 = arith.constant 1 : index
    %c2_404 = arith.constant 2 : index
    %c0_405 = arith.constant 0 : index
    %c0_406 = arith.constant 0 : index
    %620 = vector.load %arg5[%c1_403, %c2_404, %c0_405, %c0_406] : memref<2x7x1x256xf32, #tpu.memory_space<vmem>>, vector<1x1x1x256xf32>
    %621 = vector.shape_cast %620 : vector<1x1x1x256xf32> to vector<1x256xf32>
    %622 = vector.broadcast %68 : f32 to vector<1x256xf32>
    %623 = arith.mulf %622, %621 : vector<1x256xf32>
    %624 = arith.addf %619, %623 : vector<1x256xf32>
    %c0_407 = arith.constant 0 : index
    %c3_408 = arith.constant 3 : index
    %c0_409 = arith.constant 0 : index
    %c0_410 = arith.constant 0 : index
    %625 = vector.load %arg5[%c0_407, %c3_408, %c0_409, %c0_410] : memref<2x7x1x256xf32, #tpu.memory_space<vmem>>, vector<1x1x1x256xf32>
    %626 = vector.shape_cast %625 : vector<1x1x1x256xf32> to vector<1x256xf32>
    %627 = vector.broadcast %26 : f32 to vector<1x256xf32>
    %628 = arith.mulf %627, %626 : vector<1x256xf32>
    %629 = arith.addf %624, %628 : vector<1x256xf32>
    %c1_411 = arith.constant 1 : index
    %c3_412 = arith.constant 3 : index
    %c0_413 = arith.constant 0 : index
    %c0_414 = arith.constant 0 : index
    %630 = vector.load %arg5[%c1_411, %c3_412, %c0_413, %c0_414] : memref<2x7x1x256xf32, #tpu.memory_space<vmem>>, vector<1x1x1x256xf32>
    %631 = vector.shape_cast %630 : vector<1x1x1x256xf32> to vector<1x256xf32>
    %632 = vector.broadcast %75 : f32 to vector<1x256xf32>
    %633 = arith.mulf %632, %631 : vector<1x256xf32>
    %634 = arith.addf %629, %633 : vector<1x256xf32>
    %c0_415 = arith.constant 0 : index
    %c4_416 = arith.constant 4 : index
    %c0_417 = arith.constant 0 : index
    %c0_418 = arith.constant 0 : index
    %635 = vector.load %arg5[%c0_415, %c4_416, %c0_417, %c0_418] : memref<2x7x1x256xf32, #tpu.memory_space<vmem>>, vector<1x1x1x256xf32>
    %636 = vector.shape_cast %635 : vector<1x1x1x256xf32> to vector<1x256xf32>
    %637 = vector.broadcast %33 : f32 to vector<1x256xf32>
    %638 = arith.mulf %637, %636 : vector<1x256xf32>
    %639 = arith.addf %634, %638 : vector<1x256xf32>
    %c1_419 = arith.constant 1 : index
    %c4_420 = arith.constant 4 : index
    %c0_421 = arith.constant 0 : index
    %c0_422 = arith.constant 0 : index
    %640 = vector.load %arg5[%c1_419, %c4_420, %c0_421, %c0_422] : memref<2x7x1x256xf32, #tpu.memory_space<vmem>>, vector<1x1x1x256xf32>
    %641 = vector.shape_cast %640 : vector<1x1x1x256xf32> to vector<1x256xf32>
    %642 = vector.broadcast %82 : f32 to vector<1x256xf32>
    %643 = arith.mulf %642, %641 : vector<1x256xf32>
    %644 = arith.addf %639, %643 : vector<1x256xf32>
    %c0_423 = arith.constant 0 : index
    %c5_424 = arith.constant 5 : index
    %c0_425 = arith.constant 0 : index
    %c0_426 = arith.constant 0 : index
    %645 = vector.load %arg5[%c0_423, %c5_424, %c0_425, %c0_426] : memref<2x7x1x256xf32, #tpu.memory_space<vmem>>, vector<1x1x1x256xf32>
    %646 = vector.shape_cast %645 : vector<1x1x1x256xf32> to vector<1x256xf32>
    %647 = vector.broadcast %40 : f32 to vector<1x256xf32>
    %648 = arith.mulf %647, %646 : vector<1x256xf32>
    %649 = arith.addf %644, %648 : vector<1x256xf32>
    %c1_427 = arith.constant 1 : index
    %c5_428 = arith.constant 5 : index
    %c0_429 = arith.constant 0 : index
    %c0_430 = arith.constant 0 : index
    %650 = vector.load %arg5[%c1_427, %c5_428, %c0_429, %c0_430] : memref<2x7x1x256xf32, #tpu.memory_space<vmem>>, vector<1x1x1x256xf32>
    %651 = vector.shape_cast %650 : vector<1x1x1x256xf32> to vector<1x256xf32>
    %652 = vector.broadcast %89 : f32 to vector<1x256xf32>
    %653 = arith.mulf %652, %651 : vector<1x256xf32>
    %654 = arith.addf %649, %653 : vector<1x256xf32>
    %c0_431 = arith.constant 0 : index
    %c6_432 = arith.constant 6 : index
    %c0_433 = arith.constant 0 : index
    %c0_434 = arith.constant 0 : index
    %655 = vector.load %arg5[%c0_431, %c6_432, %c0_433, %c0_434] : memref<2x7x1x256xf32, #tpu.memory_space<vmem>>, vector<1x1x1x256xf32>
    %656 = vector.shape_cast %655 : vector<1x1x1x256xf32> to vector<1x256xf32>
    %657 = vector.broadcast %47 : f32 to vector<1x256xf32>
    %658 = arith.mulf %657, %656 : vector<1x256xf32>
    %659 = arith.addf %654, %658 : vector<1x256xf32>
    %c1_435 = arith.constant 1 : index
    %c6_436 = arith.constant 6 : index
    %c0_437 = arith.constant 0 : index
    %c0_438 = arith.constant 0 : index
    %660 = vector.load %arg5[%c1_435, %c6_436, %c0_437, %c0_438] : memref<2x7x1x256xf32, #tpu.memory_space<vmem>>, vector<1x1x1x256xf32>
    %661 = vector.shape_cast %660 : vector<1x1x1x256xf32> to vector<1x256xf32>
    %662 = vector.broadcast %96 : f32 to vector<1x256xf32>
    %663 = arith.mulf %662, %661 : vector<1x256xf32>
    %664 = arith.addf %659, %663 : vector<1x256xf32>
    %c254_i32 = arith.constant 254 : i32
    %665 = tpu.dynamic_rotate %664 by %c254_i32 dim 1 : vector<1x256xf32>, i32 -> vector<1x256xf32>
    %c0_i32_439 = arith.constant 0 : i32
    %666 = vector.broadcast %c0_i32_439 : i32 to vector<1x256xi32>
    %667 = arith.cmpi sge, %99, %666 : vector<1x256xi32>
    %c14_i32 = arith.constant 14 : i32
    %668 = vector.broadcast %c14_i32 : i32 to vector<1x256xi32>
    %669 = arith.cmpi slt, %99, %668 : vector<1x256xi32>
    %670 = arith.andi %667, %669 : vector<1x256xi1>
    %cst_440 = arith.constant 0.000000e+00 : f32
    %671 = vector.broadcast %cst_440 : f32 to vector<1x256xf32>
    %672 = arith.select %670, %665, %671 : vector<1x256xi1>, vector<1x256xf32>
    %673 = arith.addf %595, %672 : vector<1x256xf32>
    %c0_441 = arith.constant 0 : index
    %c0_442 = arith.constant 0 : index
    %c0_443 = arith.constant 0 : index
    %c0_444 = arith.constant 0 : index
    %674 = vector.load %arg5[%c0_441, %c0_442, %c0_443, %c0_444] : memref<2x7x1x256xf32, #tpu.memory_space<vmem>>, vector<1x1x1x256xf32>
    %675 = vector.shape_cast %674 : vector<1x1x1x256xf32> to vector<1x256xf32>
    %676 = vector.broadcast %6 : f32 to vector<1x256xf32>
    %677 = arith.mulf %676, %675 : vector<1x256xf32>
    %c1_445 = arith.constant 1 : index
    %c0_446 = arith.constant 0 : index
    %c0_447 = arith.constant 0 : index
    %c0_448 = arith.constant 0 : index
    %678 = vector.load %arg5[%c1_445, %c0_446, %c0_447, %c0_448] : memref<2x7x1x256xf32, #tpu.memory_space<vmem>>, vector<1x1x1x256xf32>
    %679 = vector.shape_cast %678 : vector<1x1x1x256xf32> to vector<1x256xf32>
    %680 = vector.broadcast %55 : f32 to vector<1x256xf32>
    %681 = arith.mulf %680, %679 : vector<1x256xf32>
    %682 = arith.addf %677, %681 : vector<1x256xf32>
    %c0_449 = arith.constant 0 : index
    %c1_450 = arith.constant 1 : index
    %c0_451 = arith.constant 0 : index
    %c0_452 = arith.constant 0 : index
    %683 = vector.load %arg5[%c0_449, %c1_450, %c0_451, %c0_452] : memref<2x7x1x256xf32, #tpu.memory_space<vmem>>, vector<1x1x1x256xf32>
    %684 = vector.shape_cast %683 : vector<1x1x1x256xf32> to vector<1x256xf32>
    %685 = vector.broadcast %13 : f32 to vector<1x256xf32>
    %686 = arith.mulf %685, %684 : vector<1x256xf32>
    %687 = arith.addf %682, %686 : vector<1x256xf32>
    %c1_453 = arith.constant 1 : index
    %c1_454 = arith.constant 1 : index
    %c0_455 = arith.constant 0 : index
    %c0_456 = arith.constant 0 : index
    %688 = vector.load %arg5[%c1_453, %c1_454, %c0_455, %c0_456] : memref<2x7x1x256xf32, #tpu.memory_space<vmem>>, vector<1x1x1x256xf32>
    %689 = vector.shape_cast %688 : vector<1x1x1x256xf32> to vector<1x256xf32>
    %690 = vector.broadcast %62 : f32 to vector<1x256xf32>
    %691 = arith.mulf %690, %689 : vector<1x256xf32>
    %692 = arith.addf %687, %691 : vector<1x256xf32>
    %c0_457 = arith.constant 0 : index
    %c2_458 = arith.constant 2 : index
    %c0_459 = arith.constant 0 : index
    %c0_460 = arith.constant 0 : index
    %693 = vector.load %arg5[%c0_457, %c2_458, %c0_459, %c0_460] : memref<2x7x1x256xf32, #tpu.memory_space<vmem>>, vector<1x1x1x256xf32>
    %694 = vector.shape_cast %693 : vector<1x1x1x256xf32> to vector<1x256xf32>
    %695 = vector.broadcast %20 : f32 to vector<1x256xf32>
    %696 = arith.mulf %695, %694 : vector<1x256xf32>
    %697 = arith.addf %692, %696 : vector<1x256xf32>
    %c1_461 = arith.constant 1 : index
    %c2_462 = arith.constant 2 : index
    %c0_463 = arith.constant 0 : index
    %c0_464 = arith.constant 0 : index
    %698 = vector.load %arg5[%c1_461, %c2_462, %c0_463, %c0_464] : memref<2x7x1x256xf32, #tpu.memory_space<vmem>>, vector<1x1x1x256xf32>
    %699 = vector.shape_cast %698 : vector<1x1x1x256xf32> to vector<1x256xf32>
    %700 = vector.broadcast %69 : f32 to vector<1x256xf32>
    %701 = arith.mulf %700, %699 : vector<1x256xf32>
    %702 = arith.addf %697, %701 : vector<1x256xf32>
    %c0_465 = arith.constant 0 : index
    %c3_466 = arith.constant 3 : index
    %c0_467 = arith.constant 0 : index
    %c0_468 = arith.constant 0 : index
    %703 = vector.load %arg5[%c0_465, %c3_466, %c0_467, %c0_468] : memref<2x7x1x256xf32, #tpu.memory_space<vmem>>, vector<1x1x1x256xf32>
    %704 = vector.shape_cast %703 : vector<1x1x1x256xf32> to vector<1x256xf32>
    %705 = vector.broadcast %27 : f32 to vector<1x256xf32>
    %706 = arith.mulf %705, %704 : vector<1x256xf32>
    %707 = arith.addf %702, %706 : vector<1x256xf32>
    %c1_469 = arith.constant 1 : index
    %c3_470 = arith.constant 3 : index
    %c0_471 = arith.constant 0 : index
    %c0_472 = arith.constant 0 : index
    %708 = vector.load %arg5[%c1_469, %c3_470, %c0_471, %c0_472] : memref<2x7x1x256xf32, #tpu.memory_space<vmem>>, vector<1x1x1x256xf32>
    %709 = vector.shape_cast %708 : vector<1x1x1x256xf32> to vector<1x256xf32>
    %710 = vector.broadcast %76 : f32 to vector<1x256xf32>
    %711 = arith.mulf %710, %709 : vector<1x256xf32>
    %712 = arith.addf %707, %711 : vector<1x256xf32>
    %c0_473 = arith.constant 0 : index
    %c4_474 = arith.constant 4 : index
    %c0_475 = arith.constant 0 : index
    %c0_476 = arith.constant 0 : index
    %713 = vector.load %arg5[%c0_473, %c4_474, %c0_475, %c0_476] : memref<2x7x1x256xf32, #tpu.memory_space<vmem>>, vector<1x1x1x256xf32>
    %714 = vector.shape_cast %713 : vector<1x1x1x256xf32> to vector<1x256xf32>
    %715 = vector.broadcast %34 : f32 to vector<1x256xf32>
    %716 = arith.mulf %715, %714 : vector<1x256xf32>
    %717 = arith.addf %712, %716 : vector<1x256xf32>
    %c1_477 = arith.constant 1 : index
    %c4_478 = arith.constant 4 : index
    %c0_479 = arith.constant 0 : index
    %c0_480 = arith.constant 0 : index
    %718 = vector.load %arg5[%c1_477, %c4_478, %c0_479, %c0_480] : memref<2x7x1x256xf32, #tpu.memory_space<vmem>>, vector<1x1x1x256xf32>
    %719 = vector.shape_cast %718 : vector<1x1x1x256xf32> to vector<1x256xf32>
    %720 = vector.broadcast %83 : f32 to vector<1x256xf32>
    %721 = arith.mulf %720, %719 : vector<1x256xf32>
    %722 = arith.addf %717, %721 : vector<1x256xf32>
    %c0_481 = arith.constant 0 : index
    %c5_482 = arith.constant 5 : index
    %c0_483 = arith.constant 0 : index
    %c0_484 = arith.constant 0 : index
    %723 = vector.load %arg5[%c0_481, %c5_482, %c0_483, %c0_484] : memref<2x7x1x256xf32, #tpu.memory_space<vmem>>, vector<1x1x1x256xf32>
    %724 = vector.shape_cast %723 : vector<1x1x1x256xf32> to vector<1x256xf32>
    %725 = vector.broadcast %41 : f32 to vector<1x256xf32>
    %726 = arith.mulf %725, %724 : vector<1x256xf32>
    %727 = arith.addf %722, %726 : vector<1x256xf32>
    %c1_485 = arith.constant 1 : index
    %c5_486 = arith.constant 5 : index
    %c0_487 = arith.constant 0 : index
    %c0_488 = arith.constant 0 : index
    %728 = vector.load %arg5[%c1_485, %c5_486, %c0_487, %c0_488] : memref<2x7x1x256xf32, #tpu.memory_space<vmem>>, vector<1x1x1x256xf32>
    %729 = vector.shape_cast %728 : vector<1x1x1x256xf32> to vector<1x256xf32>
    %730 = vector.broadcast %90 : f32 to vector<1x256xf32>
    %731 = arith.mulf %730, %729 : vector<1x256xf32>
    %732 = arith.addf %727, %731 : vector<1x256xf32>
    %c0_489 = arith.constant 0 : index
    %c6_490 = arith.constant 6 : index
    %c0_491 = arith.constant 0 : index
    %c0_492 = arith.constant 0 : index
    %733 = vector.load %arg5[%c0_489, %c6_490, %c0_491, %c0_492] : memref<2x7x1x256xf32, #tpu.memory_space<vmem>>, vector<1x1x1x256xf32>
    %734 = vector.shape_cast %733 : vector<1x1x1x256xf32> to vector<1x256xf32>
    %735 = vector.broadcast %48 : f32 to vector<1x256xf32>
    %736 = arith.mulf %735, %734 : vector<1x256xf32>
    %737 = arith.addf %732, %736 : vector<1x256xf32>
    %c1_493 = arith.constant 1 : index
    %c6_494 = arith.constant 6 : index
    %c0_495 = arith.constant 0 : index
    %c0_496 = arith.constant 0 : index
    %738 = vector.load %arg5[%c1_493, %c6_494, %c0_495, %c0_496] : memref<2x7x1x256xf32, #tpu.memory_space<vmem>>, vector<1x1x1x256xf32>
    %739 = vector.shape_cast %738 : vector<1x1x1x256xf32> to vector<1x256xf32>
    %740 = vector.broadcast %97 : f32 to vector<1x256xf32>
    %741 = arith.mulf %740, %739 : vector<1x256xf32>
    %742 = arith.addf %737, %741 : vector<1x256xf32>
    %c253_i32 = arith.constant 253 : i32
    %743 = tpu.dynamic_rotate %742 by %c253_i32 dim 1 : vector<1x256xf32>, i32 -> vector<1x256xf32>
    %c0_i32_497 = arith.constant 0 : i32
    %744 = vector.broadcast %c0_i32_497 : i32 to vector<1x256xi32>
    %745 = arith.cmpi sge, %99, %744 : vector<1x256xi32>
    %c13_i32 = arith.constant 13 : i32
    %746 = vector.broadcast %c13_i32 : i32 to vector<1x256xi32>
    %747 = arith.cmpi slt, %99, %746 : vector<1x256xi32>
    %748 = arith.andi %745, %747 : vector<1x256xi1>
    %cst_498 = arith.constant 0.000000e+00 : f32
    %749 = vector.broadcast %cst_498 : f32 to vector<1x256xf32>
    %750 = arith.select %748, %743, %749 : vector<1x256xi1>, vector<1x256xf32>
    %751 = arith.addf %673, %750 : vector<1x256xf32>
    %752 = arith.negf %751 : vector<1x256xf32>
    %753 = math.exp %752 : vector<1x256xf32>
    %cst_499 = arith.constant 1.000000e+00 : f32
    %754 = vector.broadcast %cst_499 : f32 to vector<1x256xf32>
    %755 = arith.addf %754, %753 : vector<1x256xf32>
    %756 = arith.divf %754, %755 : vector<1x256xf32>
    %c0_500 = arith.constant 0 : index
    %c0_501 = arith.constant 0 : index
    %c0_502 = arith.constant 0 : index
    %757 = vector.load %arg4[%c0_500, %c0_501, %c0_502] : memref<1x1x256xf32, #tpu.memory_space<vmem>>, vector<1x1x256xf32>
    %758 = vector.shape_cast %757 : vector<1x1x256xf32> to vector<1x256xf32>
    %759 = vector.shape_cast %756 : vector<1x256xf32> to vector<1x1x256xf32>
    tpu.vector_store %arg4[%c0_500, %c0_501, %c0_502], %759 {strides = array<i32>} : memref<1x1x256xf32, #tpu.memory_space<vmem>>, vector<1x1x256xf32>,
    return
  }
  func.func @transform_0(%arg0: i32) -> i32 {
    %c0_i32 = arith.constant 0 : i32
    %c0_i32_0 = arith.constant 0 : i32
    return %c0_i32 : i32
  }
  func.func @transform_1(%arg0: i32) -> (i32, i32) {
    %c0_i32 = arith.constant 0 : i32
    %c0_i32_0 = arith.constant 0 : i32
    %c0_i32_1 = arith.constant 0 : i32
    return %c0_i32, %c0_i32_0 : i32, i32
  }
  func.func @transform_2(%arg0: i32) -> (i32, i32, i32) {
    %c0_i32 = arith.constant 0 : i32
    %c0_i32_0 = arith.constant 0 : i32
    %c0_i32_1 = arith.constant 0 : i32
    return %arg0, %c0_i32, %c0_i32_0 : i32, i32, i32
  }
  func.func @transform_3(%arg0: i32) -> (i32, i32, i32) {
    %c0_i32 = arith.constant 0 : i32
    %c0_i32_0 = arith.constant 0 : i32
    %c0_i32_1 = arith.constant 0 : i32
    return %arg0, %c0_i32, %c0_i32_0 : i32, i32, i32
  }
}

</mosaic_0001>

<llo_original>
// kernel: tpu_custom_call.1
$region0: #{tpu_custom_call.1}
  #allocation0 [shape = 'u32[]', space=smem, size = 0x4, offset = 0x4, fixed_abs, tag = 'smem constant byte address 0x4 - core index']
  #allocation1 [shape = 'u32[72,128]{1,0:T(1,128)}', space=vmem, size = 0x9000, scoped, tag = 'internal scratch']
  #allocation2 [shape = 'f32[2,7,1,256]{3,2,1,0:T(1,128)}', space=vmem, size = 0x3800, scoped, tag = 'scratch operand']
  %s0 = inlined_call_operand.hbm [shape: f32[98], index: 0, kind: input, shape index: {}]
  %s1 = inlined_call_operand.hbm [shape: s32[1,256], index: 1, kind: input, shape index: {}]
  %s2 = inlined_call_operand.hbm [shape: f32[2,4,256], index: 2, kind: input, shape index: {}]
  %s3 = inlined_call_operand.hbm [shape: f32[2,1,256], index: 3, kind: output, shape index: {}]
  %s4 = sld [smem:[#allocation0]]
  $region57: #{tpu_custom_call.1} parent=0
    _
  %s6 = ssub.s32 1, %s4
  %s7 = scalar_select 0, %s6, %s4
  $region1: #{tpu_custom_call.1} parent=0
    #allocation3 [shape = 'u8[512]{0}', space=smem, size = 0x200, scoped, tag = 'input window, operand 0, single buffered']
    #allocation4 [shape = 's32[2]{0}', space=sflag, size = 0x8, scoped, tag = 'scoped memory for tpu_custom_call.1']
    #allocation5 [shape = 's32[2]{0}', space=sflag, size = 0x8, scoped, tag = 'scoped memory for tpu_custom_call.1']
    #allocation6 [shape = 's32[2]{0}', space=sflag, size = 0x8, scoped, tag = 'scoped memory for tpu_custom_call.1']
    #allocation7 [shape = 'u8[1024]{0}', space=vmem, size = 0x400, scoped, tag = 'input window, operand 1, single buffered']
    #allocation8 [shape = 'u8[8192]{0}', space=vmem, size = 0x2000, scoped, tag = 'input window, operand 2']
    #allocation9 [shape = 's32[2]{0}', space=sflag, size = 0x8, scoped, tag = 'scoped memory for tpu_custom_call.1']
    #allocation10 [shape = 'u8[2048]{0}', space=vmem, size = 0x800, scoped, tag = 'output window, operand 0']
    %8 = vsyncpa [#allocation6], 0
    %9 = vsyncpa [#allocation4], 0
    %10 = vsyncpa [#allocation9], 0
    %s11 = scalar_lea.sflag [#allocation9], 1
    %12 = vsyncpa %s11, 0
    %13 = vsyncpa [#allocation5], 0
    %s14 = scalar_lea.sflag [#allocation5], 1
    %15 = vsyncpa %s14, 0
    loop: start=0, step=1, limit=4
    $region2: #{tpu_custom_call.1} parent=1 // loop_pre_header
      _
    $region3: #{tpu_custom_call.1} parent=1 // loop_header
      %s17 = sphi 0, %s21
      %p18 = scmp.ge.s32.totalorder %s17, 4
      %s25 = sphi 0, %s25
      %s27 = sphi 0, %s25
      %s28 = sphi 0, %s27
      %s42 = sphi 0, %s28
      %s46 = sphi 0, %s46
      %s48 = sphi 0, %s46
      %s49 = sphi 0, %s48
      %s63 = sphi 0, %s49
      %s69 = sphi 0, %s71
      %s72 = sphi 0, %s69
      %s73 = sphi 0, %s72
      %s89 = sphi 0, %s73
      %s95 = sphi 0, %s97
      %s98 = sphi 0, %s95
      %s99 = sphi 0, %s98
      %s115 = sphi 0, %s99
    $region4: #{tpu_custom_call.1} parent=1 // loop_header_branch
      %20 = sbr.rel (%p18) target = $region8
    $region5: #{tpu_custom_call.1} parent=1 // loop_body
      %s22 = ssub.s32 %s17, 1
      %s23 = ssub.s32 %s17, 2
      %s24 = sadd.s32 %s17, 1
      %s26 = sadd.s32 %s25, 1
      %p29 = scmp.eq.s32.totalorder %s17, 1
      %p30 = scmp.ne.s32.totalorder %s25, %s27
      %p31 = scmp.eq.s32.totalorder %s17, 0
      %p32 = por %p30, %p31
      %p33 = scmp.ne.s32.totalorder %s25, %s27
      %p34 = scmp.eq.s32.totalorder %s22, 1
      %p35 = por %p33, %p34
      %p36 = scmp.ne.s32.totalorder %s27, %s28
      %p37 = scmp.eq.s32.totalorder %s22, 0
      %p38 = por %p36, %p37
      %p39 = scmp.ne.s32.totalorder %s27, %s28
      %p40 = scmp.eq.s32.totalorder %s23, 1
      %p41 = por %p39, %p40
      %p43 = scmp.ne.s32.totalorder %s28, %s42
      %p44 = scmp.eq.s32.totalorder %s23, 0
      %p45 = por %p43, %p44
      %s47 = sadd.s32 %s46, 1
      %p50 = scmp.eq.s32.totalorder %s17, 1
      %p51 = scmp.ne.s32.totalorder %s46, %s48
      %p52 = scmp.eq.s32.totalorder %s17, 0
      %p53 = por %p51, %p52
      %p54 = scmp.ne.s32.totalorder %s46, %s48
      %p55 = scmp.eq.s32.totalorder %s22, 1
      %p56 = por %p54, %p55
      %p57 = scmp.ne.s32.totalorder %s48, %s49
      %p58 = scmp.eq.s32.totalorder %s22, 0
      %p59 = por %p57, %p58
      %p60 = scmp.ne.s32.totalorder %s48, %s49
      %p61 = scmp.eq.s32.totalorder %s23, 1
      %p62 = por %p60, %p61
      %p64 = scmp.ne.s32.totalorder %s49, %s63
      %p65 = scmp.eq.s32.totalorder %s23, 0
      %p66 = por %p64, %p65
      %s67 = ssub.s32 %s17, %s24
      %p68 = scmp.eq.s32.totalorder %s67, 0
      %s70 = sadd.s32 %s69, 1
      %s71 = scalar_select %p68, %s69, %s70
      %p74 = pneg %p68
      %p75 = scmp.eq.s32.totalorder %s17, 1
      %p76 = por %p74, %p75
      %p77 = scmp.ne.s32.totalorder %s69, %s72
      %p78 = scmp.eq.s32.totalorder %s17, 0
      %p79 = por %p77, %p78
      %p80 = scmp.ne.s32.totalorder %s69, %s72
      %p81 = scmp.eq.s32.totalorder %s22, 1
      %p82 = por %p80, %p81
      %p83 = scmp.ne.s32.totalorder %s72, %s73
      %p84 = scmp.eq.s32.totalorder %s22, 0
      %p85 = por %p83, %p84
      %p86 = scmp.ne.s32.totalorder %s72, %s73
      %p87 = scmp.eq.s32.totalorder %s23, 1
      %p88 = por %p86, %p87
      %p90 = scmp.ne.s32.totalorder %s73, %s89
      %p91 = scmp.eq.s32.totalorder %s23, 0
      %p92 = por %p90, %p91
      %s93 = ssub.s32 %s17, %s24
      %p94 = scmp.eq.s32.totalorder %s93, 0
      %s96 = sadd.s32 %s95, 1
      %s97 = scalar_select %p94, %s95, %s96
      %p100 = pneg %p94
      %p101 = scmp.eq.s32.totalorder %s17, 1
      %p102 = por %p100, %p101
      %p103 = scmp.ne.s32.totalorder %s95, %s98
      %p104 = scmp.eq.s32.totalorder %s17, 0
      %p105 = por %p103, %p104
      %p106 = scmp.ne.s32.totalorder %s95, %s98
      %p107 = scmp.eq.s32.totalorder %s22, 1
      %p108 = por %p106, %p107
      %p109 = scmp.ne.s32.totalorder %s98, %s99
      %p110 = scmp.eq.s32.totalorder %s22, 0
      %p111 = por %p109, %p110
      %p112 = scmp.ne.s32.totalorder %s98, %s99
      %p113 = scmp.eq.s32.totalorder %s23, 1
      %p114 = por %p112, %p113
      %p116 = scmp.ne.s32.totalorder %s99, %s115
      %p117 = scmp.eq.s32.totalorder %s23, 0
      %p118 = por %p116, %p117
      %p119 = scmp.le.s32.totalorder 1, %s17
      %p120 = scmp.lt.s32.totalorder %s17, 3
      %p121 = pnand %p119, %p120
      %p122 = pneg %p121
      // Predicated region
      $region9: #{tpu_custom_call.1} parent=5 // pred_check
        _
      $region10: #{tpu_custom_call.1} parent=5 // pred_check_branch
        %124 = sbr.rel (%p121) target = $region12
      $region11: #{tpu_custom_call.1} parent=5 // pred_region
        %s125 = ssub.s32 %s17, 1
        // Predicated region
        $region13: #{tpu_custom_call.1} parent=11 // pred_check
          %p126 = pneg %p38
        $region14: #{tpu_custom_call.1} parent=11 // pred_check_branch
          %128 = sbr.rel (%p126) target = $region16
        $region15: #{tpu_custom_call.1} parent=11 // pred_region
          %130 = vsyncadd [#allocation6], 0
          %s132 = sshll.u32 %s0, 4
          %s133 = int_to_ptr.hbm [resolvable:$true] %s132
          %135 = dma.hbm_to_smem %s133, 16, [#allocation3], [#allocation6]
        $region16: #{tpu_custom_call.1} parent=11 // pred_fallthru
          _
        // Predicated region
        $region17: #{tpu_custom_call.1} parent=11 // pred_check
          %p136 = pneg %p59
        $region18: #{tpu_custom_call.1} parent=11 // pred_check_branch
          %138 = sbr.rel (%p136) target = $region20
        $region19: #{tpu_custom_call.1} parent=11 // pred_region
          %140 = vsyncadd [#allocation4], 0
          %s142 = sshll.u32 %s1, 4
          %s143 = int_to_ptr.hbm [resolvable:$true] %s142
          %s144 = sshll.u32 [#allocation7], 4
          %s145 = int_to_ptr.vmem [resolvable:$true] %s144
          %147 = dma.hbm_to_vmem [thread:$0]  %s143, 32, %s145, [#allocation4]
        $region20: #{tpu_custom_call.1} parent=11 // pred_fallthru
          _
      $region12: #{tpu_custom_call.1} parent=5 // pred_fallthru
        _
      %p148 = scmp.lt.s32.totalorder %s17, 2
      // Predicated region
      $region21: #{tpu_custom_call.1} parent=5 // pred_check
        %p149 = pneg %p148
      $region22: #{tpu_custom_call.1} parent=5 // pred_check_branch
        %151 = sbr.rel (%p149) target = $region24
      $region23: #{tpu_custom_call.1} parent=5 // pred_region
        // Predicated region
        $region25: #{tpu_custom_call.1} parent=23 // pred_check
          %p152 = pneg %p79
        $region26: #{tpu_custom_call.1} parent=23 // pred_check_branch
          %154 = sbr.rel (%p152) target = $region28
        $region27: #{tpu_custom_call.1} parent=23 // pred_region
          %s155 = sand.u32 %s69, 1
          %s156 = scalar_lea.sflag [#allocation9], %s155
          %s157 = sand.u32 %s69, 1
          %s158 = smul.addr %s157, 8
          %s159 = scalar_lea.vmem [#allocation8], %s158
          %161 = vsyncadd %s156, 0
          %s162 = smul.addr %s17, 2
          %s163 = smul.addr %s162, 4
          %s164 = scalar_lea.hbm %s2, %s163
          %s166 = sshll.u32 %s164, 4
          %s167 = int_to_ptr.hbm [resolvable:$true] %s166
          %s168 = sshll.u32 %s159, 4
          %s169 = int_to_ptr.vmem [resolvable:$true] %s168
          %171 = dma.hbm_to_vmem [thread:$0]  %s167, 128, %s169, %s156
        $region28: #{tpu_custom_call.1} parent=23 // pred_fallthru
          _
      $region24: #{tpu_custom_call.1} parent=5 // pred_fallthru
        _
      %p172 = scmp.le.s32.totalorder 1, %s17
      %p173 = scmp.lt.s32.totalorder %s17, 3
      %p174 = pnand %p172, %p173
      %p175 = pneg %p174
      // Predicated region
      $region29: #{tpu_custom_call.1} parent=5 // pred_check
        _
      $region30: #{tpu_custom_call.1} parent=5 // pred_check_branch
        %177 = sbr.rel (%p174) target = $region32
      $region31: #{tpu_custom_call.1} parent=5 // pred_region
        %s178 = ssub.s32 %s17, 1
        // Predicated region
        $region33: #{tpu_custom_call.1} parent=31 // pred_check
          %p179 = pneg %p38
        $region34: #{tpu_custom_call.1} parent=31 // pred_check_branch
          %181 = sbr.rel (%p179) target = $region36
        $region35: #{tpu_custom_call.1} parent=31 // pred_region
          %183 = dma.done [#allocation6], 16
        $region36: #{tpu_custom_call.1} parent=31 // pred_fallthru
          _
        // Predicated region
        $region37: #{tpu_custom_call.1} parent=31 // pred_check
          %p184 = pneg %p59
        $region38: #{tpu_custom_call.1} parent=31 // pred_check_branch
          %186 = sbr.rel (%p184) target = $region40
        $region39: #{tpu_custom_call.1} parent=31 // pred_region
          %188 = dma.done [#allocation4], 32
        $region40: #{tpu_custom_call.1} parent=31 // pred_fallthru
          _
        %s189 = sand.u32 %s72, 1
        %s190 = scalar_lea.sflag [#allocation9], %s189
        %s191 = sand.u32 %s72, 1
        %s192 = smul.addr %s191, 8
        %s193 = scalar_lea.vmem [#allocation8], %s192
        // Predicated region
        $region41: #{tpu_custom_call.1} parent=31 // pred_check
          %p194 = pneg %p85
        $region42: #{tpu_custom_call.1} parent=31 // pred_check_branch
          %196 = sbr.rel (%p194) target = $region44
        $region43: #{tpu_custom_call.1} parent=31 // pred_region
          %198 = dma.done %s190, 128
        $region44: #{tpu_custom_call.1} parent=31 // pred_fallthru
          _
        %199 = sfence
        %p200 = pneg %p38
        %p201 = pneg %p35
        %p202 = pneg %p59
        %p203 = pneg %p56
        %s204 = sand.u32 %s72, 1
        %s205 = scalar_lea.sflag [#allocation9], %s204
        %s206 = sand.u32 %s72, 1
        %s207 = smul.addr %s206, 8
        %s208 = scalar_lea.vmem [#allocation8], %s207
        %p209 = pneg %p85
        %p210 = pneg %p82
        %p211 = pneg %p111
        %p212 = pneg %p108
        %s213 = sand.u32 %s98, 1
        %s214 = scalar_lea.sflag [#allocation5], %s213
        %s215 = sand.u32 %s98, 1
        %s216 = smul.addr %s215, 2
        %s217 = scalar_lea.vmem [#allocation10], %s216
        %s218 = sld [smem:[#allocation3]]
        %s219 = sld [smem:[#allocation3 + $0x1]]
        %s220 = sld [smem:[#allocation3 + $0x2]]
        %s221 = sld [smem:[#allocation3 + $0x3]]
        %s222 = sld [smem:[#allocation3 + $0x4]]
        %s223 = sld [smem:[#allocation3 + $0x5]]
        %s224 = sld [smem:[#allocation3 + $0x6]]
        %s225 = sld [smem:[#allocation3 + $0x7]]
        %s226 = sld [smem:[#allocation3 + $0x8]]
        %s227 = sld [smem:[#allocation3 + $0x9]]
        %s228 = sld [smem:[#allocation3 + $0xa]]
        %s229 = sld [smem:[#allocation3 + $0xb]]
        %s230 = sld [smem:[#allocation3 + $0xc]]
        %s231 = sld [smem:[#allocation3 + $0xd]]
        %s232 = sld [smem:[#allocation3 + $0xe]]
        %s233 = sld [smem:[#allocation3 + $0xf]]
        %s234 = sld [smem:[#allocation3 + $0x10]]
        %s235 = sld [smem:[#allocation3 + $0x11]]
        %s236 = sld [smem:[#allocation3 + $0x12]]
        %s237 = sld [smem:[#allocation3 + $0x13]]
        %s238 = sld [smem:[#allocation3 + $0x14]]
        %s239 = sld [smem:[#allocation3 + $0x15]]
        %s240 = sld [smem:[#allocation3 + $0x16]]
        %s241 = sld [smem:[#allocation3 + $0x17]]
        %s242 = sld [smem:[#allocation3 + $0x18]]
        %s243 = sld [smem:[#allocation3 + $0x19]]
        %s244 = sld [smem:[#allocation3 + $0x1a]]
        %s245 = sld [smem:[#allocation3 + $0x1b]]
        %s246 = sld [smem:[#allocation3 + $0x1c]]
        %s247 = sld [smem:[#allocation3 + $0x1d]]
        %s248 = sld [smem:[#allocation3 + $0x1e]]
        %s249 = sld [smem:[#allocation3 + $0x1f]]
        %s250 = sld [smem:[#allocation3 + $0x20]]
        %s251 = sld [smem:[#allocation3 + $0x21]]
        %s252 = sld [smem:[#allocation3 + $0x22]]
        %s253 = sld [smem:[#allocation3 + $0x23]]
        %s254 = sld [smem:[#allocation3 + $0x24]]
        %s255 = sld [smem:[#allocation3 + $0x25]]
        %s256 = sld [smem:[#allocation3 + $0x26]]
        %s257 = sld [smem:[#allocation3 + $0x27]]
        %s258 = sld [smem:[#allocation3 + $0x28]]
        %s259 = sld [smem:[#allocation3 + $0x29]]
        %s260 = sld [smem:[#allocation3 + $0x2a]]
        %s261 = sld [smem:[#allocation3 + $0x2b]]
        %s262 = sld [smem:[#allocation3 + $0x2c]]
        %s263 = sld [smem:[#allocation3 + $0x2d]]
        %s264 = sld [smem:[#allocation3 + $0x2e]]
        %s265 = sld [smem:[#allocation3 + $0x2f]]
        %s266 = sld [smem:[#allocation3 + $0x30]]
        %s267 = sld [smem:[#allocation3 + $0x31]]
        %s268 = sld [smem:[#allocation3 + $0x32]]
        %s269 = sld [smem:[#allocation3 + $0x33]]
        %s270 = sld [smem:[#allocation3 + $0x34]]
        %s271 = sld [smem:[#allocation3 + $0x35]]
        %s272 = sld [smem:[#allocation3 + $0x36]]
        %s273 = sld [smem:[#allocation3 + $0x37]]
        %s274 = sld [smem:[#allocation3 + $0x38]]
        %s275 = sld [smem:[#allocation3 + $0x39]]
        %s276 = sld [smem:[#allocation3 + $0x3a]]
        %s277 = sld [smem:[#allocation3 + $0x3b]]
        %s278 = sld [smem:[#allocation3 + $0x3c]]
        %s279 = sld [smem:[#allocation3 + $0x3d]]
        %s280 = sld [smem:[#allocation3 + $0x3e]]
        %s281 = sld [smem:[#allocation3 + $0x3f]]
        %s282 = sld [smem:[#allocation3 + $0x40]]
        %s283 = sld [smem:[#allocation3 + $0x41]]
        %s284 = sld [smem:[#allocation3 + $0x42]]
        %s285 = sld [smem:[#allocation3 + $0x43]]
        %s286 = sld [smem:[#allocation3 + $0x44]]
        %s287 = sld [smem:[#allocation3 + $0x45]]
        %s288 = sld [smem:[#allocation3 + $0x46]]
        %s289 = sld [smem:[#allocation3 + $0x47]]
        %s290 = sld [smem:[#allocation3 + $0x48]]
        %s291 = sld [smem:[#allocation3 + $0x49]]
        %s292 = sld [smem:[#allocation3 + $0x4a]]
        %s293 = sld [smem:[#allocation3 + $0x4b]]
        %s294 = sld [smem:[#allocation3 + $0x4c]]
        %s295 = sld [smem:[#allocation3 + $0x4d]]
        %s296 = sld [smem:[#allocation3 + $0x4e]]
        %s297 = sld [smem:[#allocation3 + $0x4f]]
        %s298 = sld [smem:[#allocation3 + $0x50]]
        %s299 = sld [smem:[#allocation3 + $0x51]]
        %s300 = sld [smem:[#allocation3 + $0x52]]
        %s301 = sld [smem:[#allocation3 + $0x53]]
        %s302 = sld [smem:[#allocation3 + $0x54]]
        %s303 = sld [smem:[#allocation3 + $0x55]]
        %s304 = sld [smem:[#allocation3 + $0x56]]
        %s305 = sld [smem:[#allocation3 + $0x57]]
        %s306 = sld [smem:[#allocation3 + $0x58]]
        %s307 = sld [smem:[#allocation3 + $0x59]]
        %s308 = sld [smem:[#allocation3 + $0x5a]]
        %s309 = sld [smem:[#allocation3 + $0x5b]]
        %s310 = sld [smem:[#allocation3 + $0x5c]]
        %s311 = sld [smem:[#allocation3 + $0x5d]]
        %s312 = sld [smem:[#allocation3 + $0x5e]]
        %s313 = sld [smem:[#allocation3 + $0x5f]]
        %s314 = sld [smem:[#allocation3 + $0x60]]
        %s315 = sld [smem:[#allocation3 + $0x61]]
        %v316 = vlaneseq
        %v317 = vand.u32 %v316, 127
        %v318 = vadd.s32 %v317, 128
        %v319 = vld [vmem:[#allocation7] sm:$0x3]
        %v320 = vld [vmem:[%s193] sm:$0xff]
        %322 = vst [vmem:[#allocation1] ss:$2 sm:$0xff] %v320
        %v323 = vld.sshfl [vmem:[#allocation1] sm:$0xff pattern:$0x75316420]
        %v324 = vld.sshfl [vmem:[#allocation1 + $0x8] sm:$0xff pattern:$0x75316420]
        %vm327 = vcmask 1043456
        %v328 = vsel %vm327, %v323, 0.0
        %v329 = vrot.slane %v328, 4
        %v330 = vadd.f32 %v328, %v329
        %v331 = vrot.slane %v330, 2
        %v332 = vadd.f32 %v330, %v331
        %v333 = vrot.slane %v332, 1
        %v334 = vadd.f32 %v332, %v333
        %v335 = vsel %vm327, %v324, 0.0
        %v336 = vrot.slane %v335, 4
        %v337 = vadd.f32 %v335, %v336
        %v338 = vrot.slane %v337, 2
        %v339 = vadd.f32 %v337, %v338
        %v340 = vrot.slane %v339, 1
        %v341 = vadd.f32 %v339, %v340
        %v342 = vmul.f32 %v334, 0.25
        %v343 = vmul.f32 %v341, 0.25
        %344 = vst [vmem:[#allocation1] ss:$2 sm:$0xff] %v320
        %v345 = vld.sshfl [vmem:[#allocation1] sm:$0xff pattern:$0x75316420]
        %v346 = vld.sshfl [vmem:[#allocation1 + $0x8] sm:$0xff pattern:$0x75316420]
        %v349 = vsel %vm327, %v345, -inf
        %v350 = vrot.slane %v349, 4
        %v351 = vmax.f32 %v349, %v350
        %v352 = vrot.slane %v351, 2
        %v353 = vmax.f32 %v351, %v352
        %v354 = vrot.slane %v353, 1
        %v355 = vmax.f32 %v353, %v354
        %v356 = vsel %vm327, %v346, -inf
        %v357 = vrot.slane %v356, 4
        %v358 = vmax.f32 %v356, %v357
        %v359 = vrot.slane %v358, 2
        %v360 = vmax.f32 %v358, %v359
        %v361 = vrot.slane %v360, 1
        %v362 = vmax.f32 %v360, %v361
        %vm363 = vcmp.ge.s32.totalorder %v317, 48
        %vm364 = vcmp.ge.s32.totalorder %v318, 48
        %vm365 = vcmp.lt.s32.totalorder %v317, 256
        %vm366 = vcmp.lt.s32.totalorder %v318, 256
        %vm367 = vmand %vm363, %vm365
        %vm368 = vmand %vm364, %vm366
        %369 = vrot.lane.b32.xlu0 %v342, 48
        %v370 = vpop.permute.xlu0 %369
        %371 = vrot.lane.b32.xlu0 %v343, 48
        %v372 = vpop.permute.xlu0 %371
        %vm373 = vcmp.lt.s32.totalorder %v317, 48
        %v374 = vsel %vm373, %v370, %v372
        %v375 = vsel %vm373, %v372, %v370
        %v376 = vsel %vm367, %v375, 0.0
        %v377 = vsel %vm368, %v374, 0.0
        %v380 = vrot.slane %v377, 7
        %vm381 = vcmask 1040384
        %v382 = vsel %vm381, %v376, %v380
        %v384 = vlaneseq
        %vm385 = vcmp.ge.s32.totalorder %v384, 0
        %vm386 = vcmp.lt.s32.totalorder %v384, 256
        %vm387 = vmand %vm385, %vm386
        %388 = vst.msk [vmem:[#allocation2] sm:$0x3] %vm387, %v382
        %389 = vrot.lane.b32.xlu0 %v355, 48
        %v390 = vpop.permute.xlu0 %389
        %391 = vrot.lane.b32.xlu0 %v362, 48
        %v392 = vpop.permute.xlu0 %391
        %v393 = vsel %vm373, %v390, %v392
        %v394 = vsel %vm373, %v392, %v390
        %v395 = vsel %vm367, %v394, 0.0
        %v396 = vsel %vm368, %v393, 0.0
        %v399 = vrot.slane %v396, 7
        %v400 = vsel %vm381, %v395, %v399
        %s402 = scalar_lea.vmem [#allocation2], 14
        %403 = vst.msk [vmem:[%s402] sm:$0x3] %vm387, %v400
        %vm404 = vcmp.ge.s32.totalorder %v317, 32
        %vm405 = vcmp.ge.s32.totalorder %v318, 32
        %vm406 = vmand %vm404, %vm365
        %vm407 = vmand %vm405, %vm366
        %408 = vrot.lane.b32.xlu0 %v342, 32
        %v409 = vpop.permute.xlu0 %408
        %410 = vrot.lane.b32.xlu0 %v343, 32
        %v411 = vpop.permute.xlu0 %410
        %vm412 = vcmp.lt.s32.totalorder %v317, 32
        %v413 = vsel %vm412, %v409, %v411
        %v414 = vsel %vm412, %v411, %v409
        %v415 = vsel %vm406, %v414, 0.0
        %v416 = vsel %vm407, %v413, 0.0
        %v419 = vrot.slane %v416, 7
        %v420 = vsel %vm381, %v415, %v419
        %s422 = scalar_lea.vmem [#allocation2], 2
        %423 = vst.msk [vmem:[%s422] sm:$0x3] %vm387, %v420
        %424 = vrot.lane.b32.xlu0 %v355, 32
        %v425 = vpop.permute.xlu0 %424
        %426 = vrot.lane.b32.xlu0 %v362, 32
        %v427 = vpop.permute.xlu0 %426
        %v428 = vsel %vm412, %v425, %v427
        %v429 = vsel %vm412, %v427, %v425
        %v430 = vsel %vm406, %v429, 0.0
        %v431 = vsel %vm407, %v428, 0.0
        %v434 = vrot.slane %v431, 7
        %v435 = vsel %vm381, %v430, %v434
        %s437 = scalar_lea.vmem [#allocation2], 16
        %438 = vst.msk [vmem:[%s437] sm:$0x3] %vm387, %v435
        %vm439 = vcmp.ge.s32.totalorder %v317, 16
        %vm440 = vcmp.ge.s32.totalorder %v318, 16
        %vm441 = vmand %vm439, %vm365
        %vm442 = vmand %vm440, %vm366
        %443 = vrot.lane.b32.xlu0 %v342, 16
        %v444 = vpop.permute.xlu0 %443
        %445 = vrot.lane.b32.xlu0 %v343, 16
        %v446 = vpop.permute.xlu0 %445
        %vm447 = vcmp.lt.s32.totalorder %v317, 16
        %v448 = vsel %vm447, %v444, %v446
        %v449 = vsel %vm447, %v446, %v444
        %v450 = vsel %vm441, %v449, 0.0
        %v451 = vsel %vm442, %v448, 0.0
        %v454 = vrot.slane %v451, 7
        %v455 = vsel %vm381, %v450, %v454
        %s457 = scalar_lea.vmem [#allocation2], 4
        %458 = vst.msk [vmem:[%s457] sm:$0x3] %vm387, %v455
        %459 = vrot.lane.b32.xlu0 %v355, 16
        %v460 = vpop.permute.xlu0 %459
        %461 = vrot.lane.b32.xlu0 %v362, 16
        %v462 = vpop.permute.xlu0 %461
        %v463 = vsel %vm447, %v460, %v462
        %v464 = vsel %vm447, %v462, %v460
        %v465 = vsel %vm441, %v464, 0.0
        %v466 = vsel %vm442, %v463, 0.0
        %v469 = vrot.slane %v466, 7
        %v470 = vsel %vm381, %v465, %v469
        %s472 = scalar_lea.vmem [#allocation2], 18
        %473 = vst.msk [vmem:[%s472] sm:$0x3] %vm387, %v470
        %v476 = vrot.slane %v343, 7
        %v477 = vsel %vm381, %v342, %v476
        %s479 = scalar_lea.vmem [#allocation2], 6
        %480 = vst.msk [vmem:[%s479] sm:$0x3] %vm387, %v477
        %v483 = vrot.slane %v362, 7
        %v484 = vsel %vm381, %v355, %v483
        %s486 = scalar_lea.vmem [#allocation2], 20
        %487 = vst.msk [vmem:[%s486] sm:$0x3] %vm387, %v484
        %vm488 = vcmp.ge.s32.totalorder %v317, 0
        %vm489 = vcmp.ge.s32.totalorder %v318, 0
        %vm490 = vcmp.lt.s32.totalorder %v317, 240
        %vm491 = vcmp.lt.s32.totalorder %v318, 240
        %vm492 = vmand %vm488, %vm490
        %vm493 = vmand %vm489, %vm491
        %494 = vrot.lane.b32.xlu0 %v342, 112
        %v495 = vpop.permute.xlu0 %494
        %496 = vrot.lane.b32.xlu0 %v343, 112
        %v497 = vpop.permute.xlu0 %496
        %vm498 = vcmp.lt.s32.totalorder %v317, 112
        %v499 = vsel %vm498, %v495, %v497
        %v500 = vsel %vm498, %v497, %v495
        %v501 = vsel %vm492, %v499, 0.0
        %v502 = vsel %vm493, %v500, 0.0
        %v505 = vrot.slane %v502, 7
        %v506 = vsel %vm381, %v501, %v505
        %s508 = scalar_lea.vmem [#allocation2], 8
        %509 = vst.msk [vmem:[%s508] sm:$0x3] %vm387, %v506
        %510 = vrot.lane.b32.xlu0 %v355, 112
        %v511 = vpop.permute.xlu0 %510
        %512 = vrot.lane.b32.xlu0 %v362, 112
        %v513 = vpop.permute.xlu0 %512
        %v514 = vsel %vm498, %v511, %v513
        %v515 = vsel %vm498, %v513, %v511
        %v516 = vsel %vm492, %v514, 0.0
        %v517 = vsel %vm493, %v515, 0.0
        %v520 = vrot.slane %v517, 7
        %v521 = vsel %vm381, %v516, %v520
        %s523 = scalar_lea.vmem [#allocation2], 22
        %524 = vst.msk [vmem:[%s523] sm:$0x3] %vm387, %v521
        %vm525 = vcmp.lt.s32.totalorder %v317, 224
        %vm526 = vcmp.lt.s32.totalorder %v318, 224
        %vm527 = vmand %vm488, %vm525
        %vm528 = vmand %vm489, %vm526
        %529 = vrot.lane.b32.xlu0 %v342, 96
        %v530 = vpop.permute.xlu0 %529
        %531 = vrot.lane.b32.xlu0 %v343, 96
        %v532 = vpop.permute.xlu0 %531
        %vm533 = vcmp.lt.s32.totalorder %v317, 96
        %v534 = vsel %vm533, %v530, %v532
        %v535 = vsel %vm533, %v532, %v530
        %v536 = vsel %vm527, %v534, 0.0
        %v537 = vsel %vm528, %v535, 0.0
        %v540 = vrot.slane %v537, 7
        %v541 = vsel %vm381, %v536, %v540
        %s543 = scalar_lea.vmem [#allocation2], 10
        %544 = vst.msk [vmem:[%s543] sm:$0x3] %vm387, %v541
        %545 = vrot.lane.b32.xlu0 %v355, 96
        %v546 = vpop.permute.xlu0 %545
        %547 = vrot.lane.b32.xlu0 %v362, 96
        %v548 = vpop.permute.xlu0 %547
        %v549 = vsel %vm533, %v546, %v548
        %v550 = vsel %vm533, %v548, %v546
        %v551 = vsel %vm527, %v549, 0.0
        %v552 = vsel %vm528, %v550, 0.0
        %v555 = vrot.slane %v552, 7
        %v556 = vsel %vm381, %v551, %v555
        %s558 = scalar_lea.vmem [#allocation2], 24
        %559 = vst.msk [vmem:[%s558] sm:$0x3] %vm387, %v556
        %vm560 = vcmp.lt.s32.totalorder %v317, 208
        %vm561 = vcmp.lt.s32.totalorder %v318, 208
        %vm562 = vmand %vm488, %vm560
        %vm563 = vmand %vm489, %vm561
        %564 = vrot.lane.b32.xlu0 %v342, 80
        %v565 = vpop.permute.xlu0 %564
        %566 = vrot.lane.b32.xlu0 %v343, 80
        %v567 = vpop.permute.xlu0 %566
        %vm568 = vcmp.lt.s32.totalorder %v317, 80
        %v569 = vsel %vm568, %v565, %v567
        %v570 = vsel %vm568, %v567, %v565
        %v571 = vsel %vm562, %v569, 0.0
        %v572 = vsel %vm563, %v570, 0.0
        %v575 = vrot.slane %v572, 7
        %v576 = vsel %vm381, %v571, %v575
        %s578 = scalar_lea.vmem [#allocation2], 12
        %579 = vst.msk [vmem:[%s578] sm:$0x3] %vm387, %v576
        %580 = vrot.lane.b32.xlu0 %v355, 80
        %v581 = vpop.permute.xlu0 %580
        %582 = vrot.lane.b32.xlu0 %v362, 80
        %v583 = vpop.permute.xlu0 %582
        %v584 = vsel %vm568, %v581, %v583
        %v585 = vsel %vm568, %v583, %v581
        %v586 = vsel %vm562, %v584, 0.0
        %v587 = vsel %vm563, %v585, 0.0
        %v590 = vrot.slane %v587, 7
        %v591 = vsel %vm381, %v586, %v590
        %s593 = scalar_lea.vmem [#allocation2], 26
        %594 = vst.msk [vmem:[%s593] sm:$0x3] %vm387, %v591
        %v595 = vld [vmem:[#allocation2] sm:$0x3]
        %v596 = vstv %s218
        %v597 = vmul.f32 %v596, %v595
        %v598 = vld [vmem:[%s402] sm:$0x3]
        %v599 = vstv %s267
        %v600 = vmul.f32 %v599, %v598
        %v601 = vadd.f32 %v597, %v600
        %v602 = vld [vmem:[%s422] sm:$0x3]
        %v603 = vstv %s225
        %v604 = vmul.f32 %v603, %v602
        %v605 = vadd.f32 %v601, %v604
        %v606 = vld [vmem:[%s437] sm:$0x3]
        %v607 = vstv %s274
        %v608 = vmul.f32 %v607, %v606
        %v609 = vadd.f32 %v605, %v608
        %v610 = vld [vmem:[%s457] sm:$0x3]
        %v611 = vstv %s232
        %v612 = vmul.f32 %v611, %v610
        %v613 = vadd.f32 %v609, %v612
        %v614 = vld [vmem:[%s472] sm:$0x3]
        %v615 = vstv %s281
        %v616 = vmul.f32 %v615, %v614
        %v617 = vadd.f32 %v613, %v616
        %v618 = vld [vmem:[%s479] sm:$0x3]
        %v619 = vstv %s239
        %v620 = vmul.f32 %v619, %v618
        %v621 = vadd.f32 %v617, %v620
        %v622 = vld [vmem:[%s486] sm:$0x3]
        %v623 = vstv %s288
        %v624 = vmul.f32 %v623, %v622
        %v625 = vadd.f32 %v621, %v624
        %v626 = vld [vmem:[%s508] sm:$0x3]
        %v627 = vstv %s246
        %v628 = vmul.f32 %v627, %v626
        %v629 = vadd.f32 %v625, %v628
        %v630 = vld [vmem:[%s523] sm:$0x3]
        %v631 = vstv %s295
        %v632 = vmul.f32 %v631, %v630
        %v633 = vadd.f32 %v629, %v632
        %v634 = vld [vmem:[%s543] sm:$0x3]
        %v635 = vstv %s253
        %v636 = vmul.f32 %v635, %v634
        %v637 = vadd.f32 %v633, %v636
        %v638 = vld [vmem:[%s558] sm:$0x3]
        %v639 = vstv %s302
        %v640 = vmul.f32 %v639, %v638
        %v641 = vadd.f32 %v637, %v640
        %v642 = vld [vmem:[%s578] sm:$0x3]
        %v643 = vstv %s260
        %v644 = vmul.f32 %v643, %v642
        %v645 = vadd.f32 %v641, %v644
        %v646 = vld [vmem:[%s593] sm:$0x3]
        %v647 = vstv %s309
        %v648 = vmul.f32 %v647, %v646
        %v649 = vadd.f32 %v645, %v648
        %v651 = vperm.slane %v649, 0
        %v652 = vperm.slane %v649, 1
        %655 = vrot.lane.b32.xlu0 %v651, 3
        %v656 = vpop.permute.xlu0 %655
        %657 = vrot.lane.b32.xlu0 %v652, 3
        %v658 = vpop.permute.xlu0 %657
        %vm659 = vcmp.lt.s32.totalorder %v317, 3
        %v660 = vsel %vm659, %v656, %v658
        %v661 = vsel %vm659, %v658, %v656
        %vm662 = vcmp.ge.s32.totalorder %v319, 3
        %vm663 = vcmp.lt.s32.totalorder %v319, 16
        %vm664 = vmand %vm662, %vm663
        %v667 = vrot.slane %v660, 7
        %v668 = vsel %vm381, %v661, %v667
        %v670 = vsel %vm664, %v668, 0.0
        %v671 = vadd.f32 %v670, 0.0
        %v672 = vstv %s219
        %v673 = vmul.f32 %v672, %v595
        %v674 = vstv %s268
        %v675 = vmul.f32 %v674, %v598
        %v676 = vadd.f32 %v673, %v675
        %v677 = vstv %s226
        %v678 = vmul.f32 %v677, %v602
        %v679 = vadd.f32 %v676, %v678
        %v680 = vstv %s275
        %v681 = vmul.f32 %v680, %v606
        %v682 = vadd.f32 %v679, %v681
        %v683 = vstv %s233
        %v684 = vmul.f32 %v683, %v610
        %v685 = vadd.f32 %v682, %v684
        %v686 = vstv %s282
        %v687 = vmul.f32 %v686, %v614
        %v688 = vadd.f32 %v685, %v687
        %v689 = vstv %s240
        %v690 = vmul.f32 %v689, %v618
        %v691 = vadd.f32 %v688, %v690
        %v692 = vstv %s289
        %v693 = vmul.f32 %v692, %v622
        %v694 = vadd.f32 %v691, %v693
        %v695 = vstv %s247
        %v696 = vmul.f32 %v695, %v626
        %v697 = vadd.f32 %v694, %v696
        %v698 = vstv %s296
        %v699 = vmul.f32 %v698, %v630
        %v700 = vadd.f32 %v697, %v699
        %v701 = vstv %s254
        %v702 = vmul.f32 %v701, %v634
        %v703 = vadd.f32 %v700, %v702
        %v704 = vstv %s303
        %v705 = vmul.f32 %v704, %v638
        %v706 = vadd.f32 %v703, %v705
        %v707 = vstv %s261
        %v708 = vmul.f32 %v707, %v642
        %v709 = vadd.f32 %v706, %v708
        %v710 = vstv %s310
        %v711 = vmul.f32 %v710, %v646
        %v712 = vadd.f32 %v709, %v711
        %v714 = vperm.slane %v712, 0
        %v715 = vperm.slane %v712, 1
        %718 = vrot.lane.b32.xlu0 %v714, 2
        %v719 = vpop.permute.xlu0 %718
        %720 = vrot.lane.b32.xlu0 %v715, 2
        %v721 = vpop.permute.xlu0 %720
        %vm722 = vcmp.lt.s32.totalorder %v317, 2
        %v723 = vsel %vm722, %v719, %v721
        %v724 = vsel %vm722, %v721, %v719
        %vm725 = vcmp.ge.s32.totalorder %v319, 2
        %vm726 = vmand %vm725, %vm663
        %v729 = vrot.slane %v723, 7
        %v730 = vsel %vm381, %v724, %v729
        %v732 = vsel %vm726, %v730, 0.0
        %v733 = vadd.f32 %v671, %v732
        %v734 = vstv %s220
        %v735 = vmul.f32 %v734, %v595
        %v736 = vstv %s269
        %v737 = vmul.f32 %v736, %v598
        %v738 = vadd.f32 %v735, %v737
        %v739 = vstv %s227
        %v740 = vmul.f32 %v739, %v602
        %v741 = vadd.f32 %v738, %v740
        %v742 = vstv %s276
        %v743 = vmul.f32 %v742, %v606
        %v744 = vadd.f32 %v741, %v743
        %v745 = vstv %s234
        %v746 = vmul.f32 %v745, %v610
        %v747 = vadd.f32 %v744, %v746
        %v748 = vstv %s283
        %v749 = vmul.f32 %v748, %v614
        %v750 = vadd.f32 %v747, %v749
        %v751 = vstv %s241
        %v752 = vmul.f32 %v751, %v618
        %v753 = vadd.f32 %v750, %v752
        %v754 = vstv %s290
        %v755 = vmul.f32 %v754, %v622
        %v756 = vadd.f32 %v753, %v755
        %v757 = vstv %s248
        %v758 = vmul.f32 %v757, %v626
        %v759 = vadd.f32 %v756, %v758
        %v760 = vstv %s297
        %v761 = vmul.f32 %v760, %v630
        %v762 = vadd.f32 %v759, %v761
        %v763 = vstv %s255
        %v764 = vmul.f32 %v763, %v634
        %v765 = vadd.f32 %v762, %v764
        %v766 = vstv %s304
        %v767 = vmul.f32 %v766, %v638
        %v768 = vadd.f32 %v765, %v767
        %v769 = vstv %s262
        %v770 = vmul.f32 %v769, %v642
        %v771 = vadd.f32 %v768, %v770
        %v772 = vstv %s311
        %v773 = vmul.f32 %v772, %v646
        %v774 = vadd.f32 %v771, %v773
        %v776 = vperm.slane %v774, 0
        %v777 = vperm.slane %v774, 1
        %780 = vrot.lane.b32.xlu0 %v776, 1
        %v781 = vpop.permute.xlu0 %780
        %782 = vrot.lane.b32.xlu0 %v777, 1
        %v783 = vpop.permute.xlu0 %782
        %vm784 = vcmp.lt.s32.totalorder %v317, 1
        %v785 = vsel %vm784, %v781, %v783
        %v786 = vsel %vm784, %v783, %v781
        %vm787 = vcmp.ge.s32.totalorder %v319, 1
        %vm788 = vmand %vm787, %vm663
        %v791 = vrot.slane %v785, 7
        %v792 = vsel %vm381, %v786, %v791
        %v794 = vsel %vm788, %v792, 0.0
        %v795 = vadd.f32 %v733, %v794
        %v796 = vstv %s221
        %v797 = vmul.f32 %v796, %v595
        %v798 = vstv %s270
        %v799 = vmul.f32 %v798, %v598
        %v800 = vadd.f32 %v797, %v799
        %v801 = vstv %s228
        %v802 = vmul.f32 %v801, %v602
        %v803 = vadd.f32 %v800, %v802
        %v804 = vstv %s277
        %v805 = vmul.f32 %v804, %v606
        %v806 = vadd.f32 %v803, %v805
        %v807 = vstv %s235
        %v808 = vmul.f32 %v807, %v610
        %v809 = vadd.f32 %v806, %v808
        %v810 = vstv %s284
        %v811 = vmul.f32 %v810, %v614
        %v812 = vadd.f32 %v809, %v811
        %v813 = vstv %s242
        %v814 = vmul.f32 %v813, %v618
        %v815 = vadd.f32 %v812, %v814
        %v816 = vstv %s291
        %v817 = vmul.f32 %v816, %v622
        %v818 = vadd.f32 %v815, %v817
        %v819 = vstv %s249
        %v820 = vmul.f32 %v819, %v626
        %v821 = vadd.f32 %v818, %v820
        %v822 = vstv %s298
        %v823 = vmul.f32 %v822, %v630
        %v824 = vadd.f32 %v821, %v823
        %v825 = vstv %s256
        %v826 = vmul.f32 %v825, %v634
        %v827 = vadd.f32 %v824, %v826
        %v828 = vstv %s305
        %v829 = vmul.f32 %v828, %v638
        %v830 = vadd.f32 %v827, %v829
        %v831 = vstv %s263
        %v832 = vmul.f32 %v831, %v642
        %v833 = vadd.f32 %v830, %v832
        %v834 = vstv %s312
        %v835 = vmul.f32 %v834, %v646
        %v836 = vadd.f32 %v833, %v835
        %v837 = vadd.f32 %v795, %v836
        %v838 = vstv %s222
        %v839 = vmul.f32 %v838, %v595
        %v840 = vstv %s271
        %v841 = vmul.f32 %v840, %v598
        %v842 = vadd.f32 %v839, %v841
        %v843 = vstv %s229
        %v844 = vmul.f32 %v843, %v602
        %v845 = vadd.f32 %v842, %v844
        %v846 = vstv %s278
        %v847 = vmul.f32 %v846, %v606
        %v848 = vadd.f32 %v845, %v847
        %v849 = vstv %s236
        %v850 = vmul.f32 %v849, %v610
        %v851 = vadd.f32 %v848, %v850
        %v852 = vstv %s285
        %v853 = vmul.f32 %v852, %v614
        %v854 = vadd.f32 %v851, %v853
        %v855 = vstv %s243
        %v856 = vmul.f32 %v855, %v618
        %v857 = vadd.f32 %v854, %v856
        %v858 = vstv %s292
        %v859 = vmul.f32 %v858, %v622
        %v860 = vadd.f32 %v857, %v859
        %v861 = vstv %s250
        %v862 = vmul.f32 %v861, %v626
        %v863 = vadd.f32 %v860, %v862
        %v864 = vstv %s299
        %v865 = vmul.f32 %v864, %v630
        %v866 = vadd.f32 %v863, %v865
        %v867 = vstv %s257
        %v868 = vmul.f32 %v867, %v634
        %v869 = vadd.f32 %v866, %v868
        %v870 = vstv %s306
        %v871 = vmul.f32 %v870, %v638
        %v872 = vadd.f32 %v869, %v871
        %v873 = vstv %s264
        %v874 = vmul.f32 %v873, %v642
        %v875 = vadd.f32 %v872, %v874
        %v876 = vstv %s313
        %v877 = vmul.f32 %v876, %v646
        %v878 = vadd.f32 %v875, %v877
        %v880 = vperm.slane %v878, 0
        %v881 = vperm.slane %v878, 1
        %884 = vrot.lane.b32.xlu0 %v880, 127
        %v885 = vpop.permute.xlu0 %884
        %886 = vrot.lane.b32.xlu0 %v881, 127
        %v887 = vpop.permute.xlu0 %886
        %vm888 = vcmp.lt.s32.totalorder %v317, 127
        %v889 = vsel %vm888, %v885, %v887
        %v890 = vsel %vm888, %v887, %v885
        %vm891 = vcmp.ge.s32.totalorder %v319, 0
        %vm892 = vcmp.lt.s32.totalorder %v319, 15
        %vm893 = vmand %vm891, %vm892
        %v896 = vrot.slane %v890, 7
        %v897 = vsel %vm381, %v889, %v896
        %v899 = vsel %vm893, %v897, 0.0
        %v900 = vadd.f32 %v837, %v899
        %v901 = vstv %s223
        %v902 = vmul.f32 %v901, %v595
        %v903 = vstv %s272
        %v904 = vmul.f32 %v903, %v598
        %v905 = vadd.f32 %v902, %v904
        %v906 = vstv %s230
        %v907 = vmul.f32 %v906, %v602
        %v908 = vadd.f32 %v905, %v907
        %v909 = vstv %s279
        %v910 = vmul.f32 %v909, %v606
        %v911 = vadd.f32 %v908, %v910
        %v912 = vstv %s237
        %v913 = vmul.f32 %v912, %v610
        %v914 = vadd.f32 %v911, %v913
        %v915 = vstv %s286
        %v916 = vmul.f32 %v915, %v614
        %v917 = vadd.f32 %v914, %v916
        %v918 = vstv %s244
        %v919 = vmul.f32 %v918, %v618
        %v920 = vadd.f32 %v917, %v919
        %v921 = vstv %s293
        %v922 = vmul.f32 %v921, %v622
        %v923 = vadd.f32 %v920, %v922
        %v924 = vstv %s251
        %v925 = vmul.f32 %v924, %v626
        %v926 = vadd.f32 %v923, %v925
        %v927 = vstv %s300
        %v928 = vmul.f32 %v927, %v630
        %v929 = vadd.f32 %v926, %v928
        %v930 = vstv %s258
        %v931 = vmul.f32 %v930, %v634
        %v932 = vadd.f32 %v929, %v931
        %v933 = vstv %s307
        %v934 = vmul.f32 %v933, %v638
        %v935 = vadd.f32 %v932, %v934
        %v936 = vstv %s265
        %v937 = vmul.f32 %v936, %v642
        %v938 = vadd.f32 %v935, %v937
        %v939 = vstv %s314
        %v940 = vmul.f32 %v939, %v646
        %v941 = vadd.f32 %v938, %v940
        %v943 = vperm.slane %v941, 0
        %v944 = vperm.slane %v941, 1
        %947 = vrot.lane.b32.xlu0 %v943, 126
        %v948 = vpop.permute.xlu0 %947
        %949 = vrot.lane.b32.xlu0 %v944, 126
        %v950 = vpop.permute.xlu0 %949
        %vm951 = vcmp.lt.s32.totalorder %v317, 126
        %v952 = vsel %vm951, %v948, %v950
        %v953 = vsel %vm951, %v950, %v948
        %vm954 = vcmp.lt.s32.totalorder %v319, 14
        %vm955 = vmand %vm891, %vm954
        %v958 = vrot.slane %v953, 7
        %v959 = vsel %vm381, %v952, %v958
        %v961 = vsel %vm955, %v959, 0.0
        %v962 = vadd.f32 %v900, %v961
        %v963 = vstv %s224
        %v964 = vmul.f32 %v963, %v595
        %v965 = vstv %s273
        %v966 = vmul.f32 %v965, %v598
        %v967 = vadd.f32 %v964, %v966
        %v968 = vstv %s231
        %v969 = vmul.f32 %v968, %v602
        %v970 = vadd.f32 %v967, %v969
        %v971 = vstv %s280
        %v972 = vmul.f32 %v971, %v606
        %v973 = vadd.f32 %v970, %v972
        %v974 = vstv %s238
        %v975 = vmul.f32 %v974, %v610
        %v976 = vadd.f32 %v973, %v975
        %v977 = vstv %s287
        %v978 = vmul.f32 %v977, %v614
        %v979 = vadd.f32 %v976, %v978
        %v980 = vstv %s245
        %v981 = vmul.f32 %v980, %v618
        %v982 = vadd.f32 %v979, %v981
        %v983 = vstv %s294
        %v984 = vmul.f32 %v983, %v622
        %v985 = vadd.f32 %v982, %v984
        %v986 = vstv %s252
        %v987 = vmul.f32 %v986, %v626
        %v988 = vadd.f32 %v985, %v987
        %v989 = vstv %s301
        %v990 = vmul.f32 %v989, %v630
        %v991 = vadd.f32 %v988, %v990
        %v992 = vstv %s259
        %v993 = vmul.f32 %v992, %v634
        %v994 = vadd.f32 %v991, %v993
        %v995 = vstv %s308
        %v996 = vmul.f32 %v995, %v638
        %v997 = vadd.f32 %v994, %v996
        %v998 = vstv %s266
        %v999 = vmul.f32 %v998, %v642
        %v1000 = vadd.f32 %v997, %v999
        %v1001 = vstv %s315
        %v1002 = vmul.f32 %v1001, %v646
        %v1003 = vadd.f32 %v1000, %v1002
        %v1005 = vperm.slane %v1003, 0
        %v1006 = vperm.slane %v1003, 1
        %1009 = vrot.lane.b32.xlu0 %v1005, 125
        %v1010 = vpop.permute.xlu0 %1009
        %1011 = vrot.lane.b32.xlu0 %v1006, 125
        %v1012 = vpop.permute.xlu0 %1011
        %vm1013 = vcmp.lt.s32.totalorder %v317, 125
        %v1014 = vsel %vm1013, %v1010, %v1012
        %v1015 = vsel %vm1013, %v1012, %v1010
        %vm1016 = vcmp.lt.s32.totalorder %v319, 13
        %vm1017 = vmand %vm891, %vm1016
        %v1020 = vrot.slane %v1015, 7
        %v1021 = vsel %vm381, %v1014, %v1020
        %v1023 = vsel %vm1017, %v1021, 0.0
        %v1024 = vadd.f32 %v962, %v1023
        %v1025 = vxor.u32 %v1024, 2147483648
        %v1026 = vmul.f32 %v1025, 1.442695
        %v1027 = vpow.pop %v1026
        %v1028 = vadd.f32 %v1027, 1.0
        %v1029 = vrcp.pop %v1028
        %v1030 = vmul.f32 %v1028, %v1029
        %v1031 = vsub.f32 1.0, %v1030
        %v1032 = vmul.f32 %v1029, %v1031
        %v1033 = vadd.f32 %v1029, %v1032
        %vm1034 = vweird.f32 %v1028
        %vm1035 = vweird.f32 %v1029
        %vm1036 = vmor %vm1034, %vm1035
        %v1037 = vsel %vm1036, %v1029, %v1033
        %v1038 = vand.u32 2147483647, %v1028
        %vm1039 = vcmp.eq.f32.partialorder %v1038, 8.507059e+37
        %v1040 = vand.u32 %v1028, 2147483648
        %v1041 = vor.u32 1.1754944e-38, %v1040
        %v1042 = vsel %vm1039, %v1041, %v1037
        %v1043 = vmul.f32 1.0, %v1042
        %1044 = vst.msk [vmem:[%s217] sm:$0x3] %vm387, %v1043
        %s1045 = sand.u32 %s98, 1
        %s1046 = scalar_lea.sflag [#allocation5], %s1045
        %s1047 = sand.u32 %s98, 1
        %s1048 = smul.addr %s1047, 2
        %s1049 = scalar_lea.vmem [#allocation10], %s1048
        // Predicated region
        $region45: #{tpu_custom_call.1} parent=31 // pred_check
          %p1050 = pneg %p108
        $region46: #{tpu_custom_call.1} parent=31 // pred_check_branch
          %1052 = sbr.rel (%p1050) target = $region48
        $region47: #{tpu_custom_call.1} parent=31 // pred_region
          %1054 = vsyncadd %s1046, 0
          %s1055 = smul.addr %s22, 2
          %s1056 = scalar_lea.hbm %s3, %s1055
          %s1058 = sshll.u32 %s1049, 4
          %s1059 = int_to_ptr.vmem [resolvable:$true] %s1058
          %s1060 = sshll.u32 %s1056, 4
          %s1061 = int_to_ptr.hbm [resolvable:$true] %s1060
          %1063 = dma.vmem_to_hbm [thread:$0]  %s1059, 32, %s1061, %s1046
        $region48: #{tpu_custom_call.1} parent=31 // pred_fallthru
          _
      $region32: #{tpu_custom_call.1} parent=5 // pred_fallthru
        _
      %p1064 = scmp.le.s32.totalorder 2, %s17
      // Predicated region
      $region49: #{tpu_custom_call.1} parent=5 // pred_check
        %p1065 = pneg %p1064
      $region50: #{tpu_custom_call.1} parent=5 // pred_check_branch
        %1067 = sbr.rel (%p1065) target = $region52
      $region51: #{tpu_custom_call.1} parent=5 // pred_region
        %s1068 = ssub.s32 %s17, 2
        // Predicated region
        $region53: #{tpu_custom_call.1} parent=51 // pred_check
          %p1069 = pneg %p114
        $region54: #{tpu_custom_call.1} parent=51 // pred_check_branch
          %1071 = sbr.rel (%p1069) target = $region56
        $region55: #{tpu_custom_call.1} parent=51 // pred_region
          %s1072 = sand.u32 %s99, 1
          %s1073 = scalar_lea.sflag [#allocation5], %s1072
          %s1074 = sand.u32 %s99, 1
          %s1075 = smul.addr %s1074, 2
          %s1076 = scalar_lea.vmem [#allocation10], %s1075
          %1078 = dma.done %s1073, 32
        $region56: #{tpu_custom_call.1} parent=51 // pred_fallthru
          _
      $region52: #{tpu_custom_call.1} parent=5 // pred_fallthru
        _
    $region6: #{tpu_custom_call.1} parent=1 // loop_footer
      %s21 = sadd.s32 1, %s17
    $region7: #{tpu_custom_call.1} parent=1 // loop_footer_branch
      %16 = sbr.rel target = $region3
    $region8: #{tpu_custom_call.1} parent=1 // loop_exit
      _
    %1079 = vsyncpa [#allocation4], 1
    %s1080 = scalar_lea.sflag [#allocation4], 1
    %1081 = vsyncpa %s1080, 1
    %1082 = vsyncpa [#allocation9], 1
    %s1083 = scalar_lea.sflag [#allocation9], 1
    %1084 = vsyncpa %s1083, 1
    %1085 = vsyncpa [#allocation5], 1
    %s1086 = scalar_lea.sflag [#allocation5], 1
    %1087 = vsyncpa %s1086, 1
    %1088 = vsyncpa [#allocation6], 1
    %s1089 = scalar_lea.sflag [#allocation6], 1
    %1090 = vsyncpa %s1089, 1

</llo_original>
